<compile_context>
chip_gen: v7x
topology: tpu7x:2x2x1
jax: 0.10.0
libtpu: 0.0.40
codegen_flags: <defaults>
</compile_context>

<pallas_src>
import functools

import jax
import jax.numpy as jnp
from jax.experimental import pallas as pl
from jax.experimental.pallas import tpu as pltpu


def _round_up(x, m):
    return (x + m - 1) // m * m


def _vmem_capacity_bytes():
    """Per-core VMEM capacity, with a conservative fallback (v7x per-TC size)."""
    try:
        info = pltpu.get_tpu_info()
        for name in ("vmem_capacity_bytes", "vmem_size_bytes", "vmem_bytes"):
            v = getattr(info, name, None)
            if v:
                try:
                    return int(v)
                except (TypeError, ValueError):
                    pass
    except Exception:
        pass
    return 64 * 1024 * 1024


def bottleneck_kernel(x_ref, mask_ref, w1_ref, b1_ref, w3_ref, b2_ref,
                      w5_ref, b3_ref, *rest, margin, wp, l_core, has_downsample):
    """One batch-chunk per grid step.

    x_ref  : (1, Cin, Lchunk)  bf16, zero-padded, lane-flattened input chunk
    mask_ref: (1, Lchunk)      f32, 1.0 on valid (interior) pixels, 0.0 on halo/padding
    w1_ref : (C2, Cin)         bf16 conv1 1x1 weight with BN1 scale folded in
    b1_ref : (C2, 1)           f32 BN1 bias
    w3_ref : (3, C2, 3*C2)     bf16 conv2 3x3 weights, one matrix per kernel row,
                               the 3 kw taps stacked along the input-channel axis
    b2_ref : (C2, 1)           f32 BN2 bias
    w5_ref : (Cout, C2)        bf16 conv3 1x1 expansion weight with BN3 scale folded
    b3_ref : (Cout, 1)         f32 BN3 bias
    [wd_ref: (Cout, Cin)       bf16 downsample 1x1 weight (BNd folded)   -- only if ds]
    [bd_ref: (Cout, 1)         f32 downsample BN bias                    -- only if ds]
    o_ref  : (1, Cout, Lcore)  output chunk (core columns only)
    """
    if has_downsample:
        wd_ref, bd_ref, o_ref = rest
    else:
        (o_ref,) = rest

    x = x_ref[0]                                   # (Cin, Lchunk) bf16
    mask = mask_ref[...]                           # (1, Lchunk)  f32

    # conv1x1 + BN1 + ReLU (f32 accumulate); zero the halo so the 3x3 stage sees
    # proper zero padding (bias+ReLU would otherwise make halo lanes nonzero).
    h1 = jnp.dot(w1_ref[...], x, preferred_element_type=jnp.float32) + b1_ref[...]
    h1 = jnp.maximum(h1, 0.0) * mask               # (C2, Lchunk) f32

    # conv3x3 (stride 1, pad 1) + BN2 + ReLU: one matmul per kernel row, with the 3
    # column-shifted slices stacked along channels (K = 3*C2).
    c2 = w3_ref.shape[1]
    acc = jnp.zeros((c2, l_core), jnp.float32)
    for kh in range(3):
        base = margin + (kh - 1) * wp                      # static offsets
        rhs = jnp.concatenate(
            [h1[:, base + kw - 1: base + kw - 1 + l_core] for kw in range(3)],
            axis=0).astype(jnp.bfloat16)                   # (3*C2, Lcore)
        acc = acc + jnp.dot(w3_ref[kh], rhs, preferred_element_type=jnp.float32)
    h2 = jnp.maximum(acc + b2_ref[...], 0.0)       # (C2, Lcore) f32

    # conv1x1 expansion + BN3.
    h3 = jnp.dot(w5_ref[...], h2.astype(jnp.bfloat16),
                 preferred_element_type=jnp.float32) + b3_ref[...]

    # residual branch: identity (plain add) or folded 1x1 downsample conv + BNd.
    x_core = x[:, margin:margin + l_core]          # lane-aligned slice
    if has_downsample:
        res = jnp.dot(wd_ref[...], x_core,
                      preferred_element_type=jnp.float32) + bd_ref[...]
    else:
        res = x_core.astype(jnp.float32)

    o_ref[0] = jnp.maximum(h3 + res, 0.0).astype(o_ref.dtype)


def fold_bottleneck_params(params, *, downsampling, eps=1e-5,
                           compute_dtype=jnp.bfloat16):
    """Fold inference-mode BatchNorm into the conv weights and cast to the MXU dtype.
    Call ONCE at init time."""
    def scale(g, v):
        return g / jnp.sqrt(v + eps)

    # conv1 (1x1) + BN1
    g1, be1, m1, v1 = params['bn1']
    s1 = scale(g1, v1)
    w1f = (params['w1'][:, :, 0, 0] * s1[:, None]).astype(compute_dtype)
    b1 = (be1 - m1 * s1).reshape(-1, 1).astype(jnp.float32)

    # conv2 (3x3) + BN2: per-kernel-row weights with the 3 kw taps stacked along the
    # input-channel axis:  w3kh[kh][o, kw*C2 + i] = w2[o, i, kh, kw] * s2[o]
    g2, be2, m2, v2 = params['bn2']
    s2 = scale(g2, v2)
    w2f = params['w2'] * s2[:, None, None, None]              # (C2o, C2i, 3, 3)
    c2o, c2i = w2f.shape[0], w2f.shape[1]
    w3kh = jnp.transpose(w2f, (2, 0, 3, 1)).reshape(3, c2o, 3 * c2i)
    w3kh = w3kh.astype(compute_dtype)
    b2 = (be2 - m2 * s2).reshape(-1, 1).astype(jnp.float32)

    # conv3 (1x1 expansion) + BN3
    g3, be3, m3, v3 = params['bn3']
    s3 = scale(g3, v3)
    w5f = (params['w3'][:, :, 0, 0] * s3[:, None]).astype(compute_dtype)
    b3 = (be3 - m3 * s3).reshape(-1, 1).astype(jnp.float32)

    cin = params['w1'].shape[1]
    cout = params['w3'].shape[0]
    if downsampling:
        gd, bed, md, vd = params['bnd']
        sd = scale(gd, vd)
        wdf = (params['wd'][:, :, 0, 0] * sd[:, None]).astype(compute_dtype)
        bd = (bed - md * sd).reshape(-1, 1).astype(jnp.float32)
    else:
        assert cin == cout, "identity residual needs in_places == places*expansion"
        wdf, bd = None, None

    return (w1f, b1, w3kh, b2, w5f, b3, wdf, bd)


def bottleneck_forward(x, folded_params, *, stride=1, batch_chunk=None):
    """Bottleneck forward. x: (B, Cin, H, W) f32; folded_params from fold_bottleneck_params."""
    assert stride == 1, "TODO(synk): stride > 1 not implemented in the Pallas kernel"
    w1f, b1, w3kh, b2, w5f, b3, wdf, bd = folded_params
    has_ds = wdf is not None
    B, Cin, H, W = x.shape
    C2, Cout = w1f.shape[0], w5f.shape[0]
    out_dtype = x.dtype

    Hp, Wp = H + 2, W + 2
    npad = Hp * Wp                       # per-image lane stride (no per-image rounding)
    margin = _round_up(Wp + 1, 128)      # lane-aligned halo offset of the core region

    vmem_cap = _vmem_capacity_bytes()
    num_tc = 2 if vmem_cap <= 64 * 1024 * 1024 else 1    # v7x has 2 TCs / 64 MiB each

    if batch_chunk is None:
        # Honest per-core-lane VMEM bytes: 2x-buffered bf16 x block, 2x-buffered f32
        # output block, full-width f32 h1, stacked f32+bf16 RHS temporaries,
        # acc/h2/h3/res slabs.
        per_lane = 4 * Cin + 28 * C2 + 16 * Cout + 16
        fixed = 4 * (C2 * Cin + 9 * C2 * C2 + Cout * C2
                     + (Cout * Cin if has_ds else 0))          # 2x-buffered bf16 weights
        fixed += 2 * margin * (4 * Cin + 4 * C2 + 16)          # halo columns
        budget = int(0.7 * vmem_cap)
        max_lanes = max(npad, (budget - fixed) // per_lane)
        batch_chunk = max(1, min(B, max_lanes // npad))
        if num_tc >= 2 and B >= 2:
            batch_chunk = min(batch_chunk, -(-B // 2))         # >=2 grid steps for 2 TCs
            nc = -(-B // batch_chunk)
            if nc > 1 and nc % 2:                              # keep chunk count even
                batch_chunk = -(-B // (nc + 1))
    n_chunks = -(-B // batch_chunk)
    Bpad = n_chunks * batch_chunk

    core = batch_chunk * npad
    l_core = _round_up(core, 128)
    l_chunk = l_core + 2 * margin

    # ---- layout glue (plain JAX): NCHW -> zero-padded, lane-flattened bf16 chunks.
    xp = jnp.pad(x, ((0, Bpad - B), (0, 0), (1, 1), (1, 1)))          # (Bpad,Cin,Hp,Wp)
    xp = xp.reshape(Bpad, Cin, npad)
    xp = xp.reshape(n_chunks, batch_chunk, Cin, npad).transpose(0, 2, 1, 3)
    xp = xp.reshape(n_chunks, Cin, core)
    xp = jnp.pad(xp, ((0, 0), (0, 0), (margin, l_chunk - core - margin)))
    xp = xp.astype(jnp.bfloat16)

    interior = jnp.pad(jnp.ones((H, W), jnp.float32), ((1, 1), (1, 1))).reshape(npad)
    mask = jnp.tile(interior, batch_chunk)
    mask = jnp.pad(mask, (margin, l_chunk - core - margin)).reshape(1, l_chunk)

    kern = functools.partial(bottleneck_kernel, margin=margin, wp=Wp,
                             l_core=l_core, has_downsample=has_ds)

    cols = n_chunks * l_core
    flops = 2 * cols * (Cin * C2 + 9 * C2 * C2 + C2 * Cout
                        + (Cin * Cout if has_ds else 0))
    bytes_accessed = (2 * n_chunks * Cin * l_chunk            # bf16 x
                      + 4 * n_chunks * Cout * l_core          # f32 out
                      + 4 * n_chunks * l_chunk                # mask
                      + 2 * (w1f.size + w3kh.size + w5f.size
                             + (wdf.size if has_ds else 0)))

    in_specs = [
        pl.BlockSpec((1, Cin, l_chunk), lambda c: (c, 0, 0)),
        pl.BlockSpec((1, l_chunk), lambda c: (0, 0)),
        pl.BlockSpec((C2, Cin), lambda c: (0, 0)),
        pl.BlockSpec((C2, 1), lambda c: (0, 0)),
        pl.BlockSpec((3, C2, 3 * C2), lambda c: (0, 0, 0)),
        pl.BlockSpec((C2, 1), lambda c: (0, 0)),
        pl.BlockSpec((Cout, C2), lambda c: (0, 0)),
        pl.BlockSpec((Cout, 1), lambda c: (0, 0)),
    ]
    args = [xp, mask, w1f, b1, w3kh, b2, w5f, b3]
    if has_ds:
        in_specs += [pl.BlockSpec((Cout, Cin), lambda c: (0, 0)),
                     pl.BlockSpec((Cout, 1), lambda c: (0, 0))]
        args += [wdf, bd]

    out = pl.pallas_call(
        kern,
        out_shape=jax.ShapeDtypeStruct((n_chunks, Cout, l_core), out_dtype),
        grid_spec=pltpu.PrefetchScalarGridSpec(
            num_scalar_prefetch=0,
            grid=(n_chunks,),
            in_specs=in_specs,
            out_specs=pl.BlockSpec((1, Cout, l_core), lambda c: (c, 0, 0)),
        ),
        compiler_params=pltpu.CompilerParams(
            dimension_semantics=("parallel",),
            vmem_limit_bytes=int(0.85 * vmem_cap)),
        cost_estimate=pl.CostEstimate(flops=int(flops), transcendentals=0,
                                      bytes_accessed=int(bytes_accessed)),
    )(*args)

    # ---- unpack: (n_chunks, Cout, l_core) -> (B, Cout, H, W)
    out = out[:, :, :core].reshape(n_chunks, Cout, batch_chunk, npad)
    out = out.transpose(0, 2, 1, 3).reshape(Bpad, Cout, npad)[:B]
    out = out.reshape(B, Cout, Hp, Wp)[:, :, 1:H + 1, 1:W + 1]
    return out


def bottleneck_ref(x, params, *, stride=1, downsampling=False, eps=1e-5):
    """Pure-JAX f32 reference (inference-mode BN)."""
    hp = jax.lax.Precision.HIGHEST

    def conv(y, w, s, pad):
        return jax.lax.conv_general_dilated(
            y, w, window_strides=(s, s), padding=((pad, pad), (pad, pad)),
            dimension_numbers=('NCHW', 'OIHW', 'NCHW'), precision=hp)

    def bn(y, g, b, m, v):
        sc = g / jnp.sqrt(v + eps)
        return y * sc[None, :, None, None] + (b - m * sc)[None, :, None, None]

    out = jax.nn.relu(bn(conv(x, params['w1'], 1, 0), *params['bn1']))
    out = jax.nn.relu(bn(conv(out, params['w2'], stride, 1), *params['bn2']))
    out = bn(conv(out, params['w3'], 1, 0), *params['bn3'])
    res = x
    if downsampling:
        res = bn(conv(x, params['wd'], stride, 0), *params['bnd'])
    return jax.nn.relu(out + res)


if __name__ == "__main__":
    key = jax.random.PRNGKey(0)

    def bn_params(k, c):
        g = 1.0 + 0.1 * jax.random.normal(k, (c,), jnp.float32)
        b = 0.1 * jax.random.normal(jax.random.fold_in(k, 1), (c,), jnp.float32)
        m = 0.1 * jax.random.normal(jax.random.fold_in(k, 2), (c,), jnp.float32)
        v = jnp.abs(1.0 + 0.1 * jax.random.normal(jax.random.fold_in(k, 3), (c,), jnp.float32))
        return (g, b, m, v)

    def make_params(k, cin, places, expansion, downsampling):
        cout = places * expansion
        ks = jax.random.split(k, 8)
        p = {
            'w1': jax.random.normal(ks[0], (places, cin, 1, 1), jnp.float32) / jnp.sqrt(cin),
            'bn1': bn_params(ks[1], places),
            'w2': jax.random.normal(ks[2], (places, places, 3, 3), jnp.float32) / jnp.sqrt(9.0 * places),
            'bn2': bn_params(ks[3], places),
            'w3': jax.random.normal(ks[4], (cout, places, 1, 1), jnp.float32) / jnp.sqrt(places),
            'bn3': bn_params(ks[5], cout),
        }
        if downsampling:
            p['wd'] = jax.random.normal(ks[6], (cout, cin, 1, 1), jnp.float32) / jnp.sqrt(cin)
            p['bnd'] = bn_params(ks[7], cout)
        return p

    B, H, W = 2, 16, 16
    configs = [
        dict(in_places=32, places=8, expansion=4, downsampling=False),
        dict(in_places=16, places=8, expansion=4, downsampling=True),
    ]
    for i, cfg in enumerate(configs):
        kp, kx = jax.random.split(jax.random.fold_in(key, i))
        params = make_params(kp, cfg['in_places'], cfg['places'],
                             cfg['expansion'], cfg['downsampling'])
        x = jax.random.normal(kx, (B, cfg['in_places'], H, W), jnp.float32)

        folded = fold_bottleneck_params(params, downsampling=cfg['downsampling'])
        out = jax.block_until_ready(bottleneck_forward(x, folded, stride=1))
        ref = bottleneck_ref(x, params, stride=1, downsampling=cfg['downsampling'])

        assert out.shape == ref.shape
        # bf16 MXU path -> looser tolerance than the f32 reference.
        assert jnp.allclose(out, ref, atol=1e-1, rtol=5e-2), \
            f"mismatch vs reference (config {i}), max|diff|={jnp.max(jnp.abs(out - ref))}"

    print("KERNEL_OK")
</pallas_src>

<mosaic_0001>
module attributes {stable_mosaic.version = 11 : i64} {
  func.func @bottleneck_kernel(%arg0: i32, %arg1: memref<1x32x640xbf16, #tpu.memory_space<vmem>>, %arg2: memref<1x640xf32, #tpu.memory_space<vmem>>, %arg3: memref<8x32xbf16, #tpu.memory_space<vmem>>, %arg4: memref<8x1xf32, #tpu.memory_space<vmem>>, %arg5: memref<3x8x24xbf16, #tpu.memory_space<vmem>>, %arg6: memref<8x1xf32, #tpu.memory_space<vmem>>, %arg7: memref<32x8xbf16, #tpu.memory_space<vmem>>, %arg8: memref<32x1xf32, #tpu.memory_space<vmem>>, %arg9: memref<1x32x384xf32, #tpu.memory_space<vmem>>) attributes {dimension_semantics = [#tpu.dimension_semantics<parallel>], iteration_bounds = array<i64: 2>, scalar_prefetch = 0 : i64, scratch_operands = 0 : i64, tpu.core_type = #tpu.core_type<tc>, window_params = [{transform_indices = @transform_0, window_bounds = array<i64: 1, 32, 640>}, {pipeline_mode = #tpu.pipeline_mode<synchronous>, transform_indices = @transform_1, window_bounds = array<i64: 1, 640>}, {pipeline_mode = #tpu.pipeline_mode<synchronous>, transform_indices = @transform_2, window_bounds = array<i64: 8, 32>}, {pipeline_mode = #tpu.pipeline_mode<synchronous>, transform_indices = @transform_3, window_bounds = array<i64: 8, 1>}, {pipeline_mode = #tpu.pipeline_mode<synchronous>, transform_indices = @transform_4, window_bounds = array<i64: 3, 8, 24>}, {pipeline_mode = #tpu.pipeline_mode<synchronous>, transform_indices = @transform_5, window_bounds = array<i64: 8, 1>}, {pipeline_mode = #tpu.pipeline_mode<synchronous>, transform_indices = @transform_6, window_bounds = array<i64: 32, 8>}, {pipeline_mode = #tpu.pipeline_mode<synchronous>, transform_indices = @transform_7, window_bounds = array<i64: 32, 1>}, {transform_indices = @transform_8, window_bounds = array<i64: 1, 32, 384>}]} {
    %c0 = arith.constant 0 : index
    %c0_0 = arith.constant 0 : index
    %c0_1 = arith.constant 0 : index
    %0 = vector.load %arg1[%c0, %c0_0, %c0_1] : memref<1x32x640xbf16, #tpu.memory_space<vmem>>, vector<1x32x640xbf16>
    %1 = vector.shape_cast %0 : vector<1x32x640xbf16> to vector<32x640xbf16>
    %c0_2 = arith.constant 0 : index
    %c0_3 = arith.constant 0 : index
    %2 = vector.load %arg2[%c0_2, %c0_3] : memref<1x640xf32, #tpu.memory_space<vmem>>, vector<1x640xf32>
    %c0_4 = arith.constant 0 : index
    %c0_5 = arith.constant 0 : index
    %3 = vector.load %arg3[%c0_4, %c0_5] : memref<8x32xbf16, #tpu.memory_space<vmem>>, vector<8x32xbf16>
    %cst = arith.constant dense<0.000000e+00> : vector<8x640xf32>
    %4 = tpu.matmul %3, %1, %cst {dimension_numbers = #tpu.dot_dimension_numbers<[1], [0], [0], [1], [0, 0, 1, 1], [], []>} : vector<8x32xbf16>, vector<32x640xbf16>, vector<8x640xf32> -> vector<8x640xf32>
    %c0_6 = arith.constant 0 : index
    %c0_7 = arith.constant 0 : index
    %5 = vector.load %arg4[%c0_6, %c0_7] : memref<8x1xf32, #tpu.memory_space<vmem>>, vector<8x1xf32>
    %6 = vector.broadcast %5 : vector<8x1xf32> to vector<8x640xf32>
    %7 = arith.addf %4, %6 : vector<8x640xf32>
    %cst_8 = arith.constant 0.000000e+00 : f32
    %8 = vector.broadcast %cst_8 : f32 to vector<8x640xf32>
    %9 = arith.maximumf %7, %8 : vector<8x640xf32>
    %10 = vector.broadcast %2 : vector<1x640xf32> to vector<8x640xf32>
    %11 = arith.mulf %9, %10 : vector<8x640xf32>
    %cst_9 = arith.constant 0.000000e+00 : f32
    %12 = vector.broadcast %cst_9 : f32 to vector<8x384xf32>
    %13 = vector.extract_strided_slice %11 {offsets = [0, 109], sizes = [8, 384], strides = [1, 1]} : vector<8x640xf32> to vector<8x384xf32>
    %14 = vector.extract_strided_slice %11 {offsets = [0, 110], sizes = [8, 384], strides = [1, 1]} : vector<8x640xf32> to vector<8x384xf32>
    %15 = vector.extract_strided_slice %11 {offsets = [0, 111], sizes = [8, 384], strides = [1, 1]} : vector<8x640xf32> to vector<8x384xf32>
    %16 = tpu.concatenate %13, %14, %15 in 0 : vector<8x384xf32>, vector<8x384xf32>, vector<8x384xf32> -> vector<24x384xf32>
    %17 = arith.truncf %16 : vector<24x384xf32> to vector<24x384xbf16>
    %c0_10 = arith.constant 0 : index
    %c0_11 = arith.constant 0 : index
    %c0_12 = arith.constant 0 : index
    %18 = vector.load %arg5[%c0_10, %c0_11, %c0_12] : memref<3x8x24xbf16, #tpu.memory_space<vmem>>, vector<1x8x24xbf16>
    %19 = vector.shape_cast %18 : vector<1x8x24xbf16> to vector<8x24xbf16>
    %cst_13 = arith.constant dense<0.000000e+00> : vector<8x384xf32>
    %20 = tpu.matmul %19, %17, %cst_13 {dimension_numbers = #tpu.dot_dimension_numbers<[1], [0], [0], [1], [0, 0, 1, 1], [], []>} : vector<8x24xbf16>, vector<24x384xbf16>, vector<8x384xf32> -> vector<8x384xf32>
    %21 = arith.addf %12, %20 : vector<8x384xf32>
    %22 = vector.extract_strided_slice %11 {offsets = [0, 127], sizes = [8, 384], strides = [1, 1]} : vector<8x640xf32> to vector<8x384xf32>
    %23 = vector.extract_strided_slice %11 {offsets = [0, 128], sizes = [8, 384], strides = [1, 1]} : vector<8x640xf32> to vector<8x384xf32>
    %24 = vector.extract_strided_slice %11 {offsets = [0, 129], sizes = [8, 384], strides = [1, 1]} : vector<8x640xf32> to vector<8x384xf32>
    %25 = tpu.concatenate %22, %23, %24 in 0 : vector<8x384xf32>, vector<8x384xf32>, vector<8x384xf32> -> vector<24x384xf32>
    %26 = arith.truncf %25 : vector<24x384xf32> to vector<24x384xbf16>
    %c1 = arith.constant 1 : index
    %c0_14 = arith.constant 0 : index
    %c0_15 = arith.constant 0 : index
    %27 = vector.load %arg5[%c1, %c0_14, %c0_15] : memref<3x8x24xbf16, #tpu.memory_space<vmem>>, vector<1x8x24xbf16>
    %28 = vector.shape_cast %27 : vector<1x8x24xbf16> to vector<8x24xbf16>
    %cst_16 = arith.constant dense<0.000000e+00> : vector<8x384xf32>
    %29 = tpu.matmul %28, %26, %cst_16 {dimension_numbers = #tpu.dot_dimension_numbers<[1], [0], [0], [1], [0, 0, 1, 1], [], []>} : vector<8x24xbf16>, vector<24x384xbf16>, vector<8x384xf32> -> vector<8x384xf32>
    %30 = arith.addf %21, %29 : vector<8x384xf32>
    %31 = vector.extract_strided_slice %11 {offsets = [0, 145], sizes = [8, 384], strides = [1, 1]} : vector<8x640xf32> to vector<8x384xf32>
    %32 = vector.extract_strided_slice %11 {offsets = [0, 146], sizes = [8, 384], strides = [1, 1]} : vector<8x640xf32> to vector<8x384xf32>
    %33 = vector.extract_strided_slice %11 {offsets = [0, 147], sizes = [8, 384], strides = [1, 1]} : vector<8x640xf32> to vector<8x384xf32>
    %34 = tpu.concatenate %31, %32, %33 in 0 : vector<8x384xf32>, vector<8x384xf32>, vector<8x384xf32> -> vector<24x384xf32>
    %35 = arith.truncf %34 : vector<24x384xf32> to vector<24x384xbf16>
    %c2 = arith.constant 2 : index
    %c0_17 = arith.constant 0 : index
    %c0_18 = arith.constant 0 : index
    %36 = vector.load %arg5[%c2, %c0_17, %c0_18] : memref<3x8x24xbf16, #tpu.memory_space<vmem>>, vector<1x8x24xbf16>
    %37 = vector.shape_cast %36 : vector<1x8x24xbf16> to vector<8x24xbf16>
    %cst_19 = arith.constant dense<0.000000e+00> : vector<8x384xf32>
    %38 = tpu.matmul %37, %35, %cst_19 {dimension_numbers = #tpu.dot_dimension_numbers<[1], [0], [0], [1], [0, 0, 1, 1], [], []>} : vector<8x24xbf16>, vector<24x384xbf16>, vector<8x384xf32> -> vector<8x384xf32>
    %39 = arith.addf %30, %38 : vector<8x384xf32>
    %c0_20 = arith.constant 0 : index
    %c0_21 = arith.constant 0 : index
    %40 = vector.load %arg6[%c0_20, %c0_21] : memref<8x1xf32, #tpu.memory_space<vmem>>, vector<8x1xf32>
    %41 = vector.broadcast %40 : vector<8x1xf32> to vector<8x384xf32>
    %42 = arith.addf %39, %41 : vector<8x384xf32>
    %cst_22 = arith.constant 0.000000e+00 : f32
    %43 = vector.broadcast %cst_22 : f32 to vector<8x384xf32>
    %44 = arith.maximumf %42, %43 : vector<8x384xf32>
    %c0_23 = arith.constant 0 : index
    %c0_24 = arith.constant 0 : index
    %45 = vector.load %arg7[%c0_23, %c0_24] : memref<32x8xbf16, #tpu.memory_space<vmem>>, vector<32x8xbf16>
    %46 = arith.truncf %44 : vector<8x384xf32> to vector<8x384xbf16>
    %cst_25 = arith.constant dense<0.000000e+00> : vector<32x384xf32>
    %47 = tpu.matmul %45, %46, %cst_25 {dimension_numbers = #tpu.dot_dimension_numbers<[1], [0], [0], [1], [0, 0, 1, 1], [], []>} : vector<32x8xbf16>, vector<8x384xbf16>, vector<32x384xf32> -> vector<32x384xf32>
    %c0_26 = arith.constant 0 : index
    %c0_27 = arith.constant 0 : index
    %48 = vector.load %arg8[%c0_26, %c0_27] : memref<32x1xf32, #tpu.memory_space<vmem>>, vector<32x1xf32>
    %49 = vector.broadcast %48 : vector<32x1xf32> to vector<32x384xf32>
    %50 = arith.addf %47, %49 : vector<32x384xf32>
    %51 = vector.extract_strided_slice %1 {offsets = [0, 128], sizes = [32, 384], strides = [1, 1]} : vector<32x640xbf16> to vector<32x384xbf16>
    %52 = arith.extf %51 : vector<32x384xbf16> to vector<32x384xf32>
    %53 = arith.addf %50, %52 : vector<32x384xf32>
    %cst_28 = arith.constant 0.000000e+00 : f32
    %54 = vector.broadcast %cst_28 : f32 to vector<32x384xf32>
    %55 = arith.maximumf %53, %54 : vector<32x384xf32>
    %c0_29 = arith.constant 0 : index
    %c0_30 = arith.constant 0 : index
    %c0_31 = arith.constant 0 : index
    %56 = vector.load %arg9[%c0_29, %c0_30, %c0_31] : memref<1x32x384xf32, #tpu.memory_space<vmem>>, vector<1x32x384xf32>
    %57 = vector.shape_cast %56 : vector<1x32x384xf32> to vector<32x384xf32>
    %58 = vector.shape_cast %55 : vector<32x384xf32> to vector<1x32x384xf32>
    tpu.vector_store %arg9[%c0_29, %c0_30, %c0_31], %58 {strides = array<i32>} : memref<1x32x384xf32, #tpu.memory_space<vmem>>, vector<1x32x384xf32>,
    return
  }
  func.func @transform_0(%arg0: i32) -> (i32, i32, i32) {
    %c0_i32 = arith.constant 0 : i32
    %c0_i32_0 = arith.constant 0 : i32
    %c0_i32_1 = arith.constant 0 : i32
    return %arg0, %c0_i32, %c0_i32_0 : i32, i32, i32
  }
  func.func @transform_1(%arg0: i32) -> (i32, i32) {
    %c0_i32 = arith.constant 0 : i32
    %c0_i32_0 = arith.constant 0 : i32
    %c0_i32_1 = arith.constant 0 : i32
    return %c0_i32, %c0_i32_0 : i32, i32
  }
  func.func @transform_2(%arg0: i32) -> (i32, i32) {
    %c0_i32 = arith.constant 0 : i32
    %c0_i32_0 = arith.constant 0 : i32
    %c0_i32_1 = arith.constant 0 : i32
    return %c0_i32, %c0_i32_0 : i32, i32
  }
  func.func @transform_3(%arg0: i32) -> (i32, i32) {
    %c0_i32 = arith.constant 0 : i32
    %c0_i32_0 = arith.constant 0 : i32
    %c0_i32_1 = arith.constant 0 : i32
    return %c0_i32, %c0_i32_0 : i32, i32
  }
  func.func @transform_4(%arg0: i32) -> (i32, i32, i32) {
    %c0_i32 = arith.constant 0 : i32
    %c0_i32_0 = arith.constant 0 : i32
    %c0_i32_1 = arith.constant 0 : i32
    %c0_i32_2 = arith.constant 0 : i32
    return %c0_i32, %c0_i32_0, %c0_i32_1 : i32, i32, i32
  }
  func.func @transform_5(%arg0: i32) -> (i32, i32) {
    %c0_i32 = arith.constant 0 : i32
    %c0_i32_0 = arith.constant 0 : i32
    %c0_i32_1 = arith.constant 0 : i32
    return %c0_i32, %c0_i32_0 : i32, i32
  }
  func.func @transform_6(%arg0: i32) -> (i32, i32) {
    %c0_i32 = arith.constant 0 : i32
    %c0_i32_0 = arith.constant 0 : i32
    %c0_i32_1 = arith.constant 0 : i32
    return %c0_i32, %c0_i32_0 : i32, i32
  }
  func.func @transform_7(%arg0: i32) -> (i32, i32) {
    %c0_i32 = arith.constant 0 : i32
    %c0_i32_0 = arith.constant 0 : i32
    %c0_i32_1 = arith.constant 0 : i32
    return %c0_i32, %c0_i32_0 : i32, i32
  }
  func.func @transform_8(%arg0: i32) -> (i32, i32, i32) {
    %c0_i32 = arith.constant 0 : i32
    %c0_i32_0 = arith.constant 0 : i32
    %c0_i32_1 = arith.constant 0 : i32
    return %arg0, %c0_i32, %c0_i32_0 : i32, i32, i32
  }
}

</mosaic_0001>

<llo_original>
// kernel: tpu_custom_call.1
$region0: #{tpu_custom_call.1}
  #allocation0 [shape = 'u32[]', space=smem, size = 0x4, offset = 0x4, fixed_abs, tag = 'smem constant byte address 0x4 - core index']
  #allocation1 [shape = 'u32[144,128]{1,0:T(1,128)}', space=vmem, size = 0x12000, scoped, tag = 'internal scratch']
  %s0 = inlined_call_operand.hbm [shape: bf16[2,32,640], index: 0, kind: input, shape index: {}]
  %s1 = inlined_call_operand.vmem [shape: f32[1,640], index: 1, kind: input, shape index: {}]
  %s2 = inlined_call_operand.vmem [shape: bf16[8,32], index: 2, kind: input, shape index: {}]
  %s3 = inlined_call_operand.vmem [shape: f32[8,1], index: 3, kind: input, shape index: {}]
  %s4 = inlined_call_operand.vmem [shape: bf16[3,8,24], index: 4, kind: input, shape index: {}]
  %s5 = inlined_call_operand.vmem [shape: f32[8,1], index: 5, kind: input, shape index: {}]
  %s6 = inlined_call_operand.vmem [shape: bf16[32,8], index: 6, kind: input, shape index: {}]
  %s7 = inlined_call_operand.vmem [shape: f32[32,1], index: 7, kind: input, shape index: {}]
  %s8 = inlined_call_operand.hbm [shape: f32[2,32,384], index: 8, kind: output, shape index: {}]
  %s9 = sld [smem:[#allocation0]]
  $region69: #{tpu_custom_call.1} parent=0
    _
  %s11 = ssub.s32 1, %s9
  %s12 = scalar_select 0, %s11, %s9
  $region1: #{tpu_custom_call.1} parent=0
    #allocation2 [shape = 'u8[81920]{0}', space=vmem, size = 0x14000, scoped, tag = 'input window, operand 0']
    #allocation3 [shape = 's32[2]{0}', space=sflag, size = 0x8, scoped, tag = 'scoped memory for tpu_custom_call.1']
    #allocation4 [shape = 's32[2]{0}', space=sflag, size = 0x8, scoped, tag = 'scoped memory for tpu_custom_call.1']
    #allocation5 [shape = 'u8[98304]{0}', space=vmem, size = 0x18000, scoped, tag = 'output window, operand 0']
    %13 = vsyncpa [#allocation3], 0
    %s14 = scalar_lea.sflag [#allocation3], 1
    %15 = vsyncpa %s14, 0
    %16 = vsyncpa [#allocation4], 0
    %s17 = scalar_lea.sflag [#allocation4], 1
    %18 = vsyncpa %s17, 0
    loop: start=0, step=1, limit=4
    $region2: #{tpu_custom_call.1} parent=1 // loop_pre_header
      _
    $region3: #{tpu_custom_call.1} parent=1 // loop_header
      %s20 = sphi 0, %s24
      %p21 = scmp.ge.s32.totalorder %s20, 4
      %s30 = sphi 0, %s32
      %s33 = sphi 0, %s30
      %s34 = sphi 0, %s33
      %s50 = sphi 0, %s34
      %s54 = sphi 0, %s54
      %s56 = sphi 0, %s54
      %s57 = sphi 0, %s56
      %s71 = sphi 0, %s57
      %s75 = sphi 0, %s75
      %s77 = sphi 0, %s75
      %s78 = sphi 0, %s77
      %s92 = sphi 0, %s78
      %s96 = sphi 0, %s96
      %s98 = sphi 0, %s96
      %s99 = sphi 0, %s98
      %s113 = sphi 0, %s99
      %s117 = sphi 0, %s117
      %s119 = sphi 0, %s117
      %s120 = sphi 0, %s119
      %s134 = sphi 0, %s120
      %s138 = sphi 0, %s138
      %s140 = sphi 0, %s138
      %s141 = sphi 0, %s140
      %s155 = sphi 0, %s141
      %s159 = sphi 0, %s159
      %s161 = sphi 0, %s159
      %s162 = sphi 0, %s161
      %s176 = sphi 0, %s162
      %s180 = sphi 0, %s180
      %s182 = sphi 0, %s180
      %s183 = sphi 0, %s182
      %s197 = sphi 0, %s183
      %s203 = sphi 0, %s205
      %s206 = sphi 0, %s203
      %s207 = sphi 0, %s206
      %s223 = sphi 0, %s207
    $region4: #{tpu_custom_call.1} parent=1 // loop_header_branch
      %23 = sbr.rel (%p21) target = $region8
    $region5: #{tpu_custom_call.1} parent=1 // loop_body
      %s25 = ssub.s32 %s20, 1
      %s26 = ssub.s32 %s20, 2
      %s27 = sadd.s32 %s20, 1
      %s28 = ssub.s32 %s20, %s27
      %p29 = scmp.eq.s32.totalorder %s28, 0
      %s31 = sadd.s32 %s30, 1
      %s32 = scalar_select %p29, %s30, %s31
      %p35 = pneg %p29
      %p36 = scmp.eq.s32.totalorder %s20, 1
      %p37 = por %p35, %p36
      %p38 = scmp.ne.s32.totalorder %s30, %s33
      %p39 = scmp.eq.s32.totalorder %s20, 0
      %p40 = por %p38, %p39
      %p41 = scmp.ne.s32.totalorder %s30, %s33
      %p42 = scmp.eq.s32.totalorder %s25, 1
      %p43 = por %p41, %p42
      %p44 = scmp.ne.s32.totalorder %s33, %s34
      %p45 = scmp.eq.s32.totalorder %s25, 0
      %p46 = por %p44, %p45
      %p47 = scmp.ne.s32.totalorder %s33, %s34
      %p48 = scmp.eq.s32.totalorder %s26, 1
      %p49 = por %p47, %p48
      %p51 = scmp.ne.s32.totalorder %s34, %s50
      %p52 = scmp.eq.s32.totalorder %s26, 0
      %p53 = por %p51, %p52
      %s55 = sadd.s32 %s54, 1
      %p58 = scmp.eq.s32.totalorder %s20, 1
      %p59 = scmp.ne.s32.totalorder %s54, %s56
      %p60 = scmp.eq.s32.totalorder %s20, 0
      %p61 = por %p59, %p60
      %p62 = scmp.ne.s32.totalorder %s54, %s56
      %p63 = scmp.eq.s32.totalorder %s25, 1
      %p64 = por %p62, %p63
      %p65 = scmp.ne.s32.totalorder %s56, %s57
      %p66 = scmp.eq.s32.totalorder %s25, 0
      %p67 = por %p65, %p66
      %p68 = scmp.ne.s32.totalorder %s56, %s57
      %p69 = scmp.eq.s32.totalorder %s26, 1
      %p70 = por %p68, %p69
      %p72 = scmp.ne.s32.totalorder %s57, %s71
      %p73 = scmp.eq.s32.totalorder %s26, 0
      %p74 = por %p72, %p73
      %s76 = sadd.s32 %s75, 1
      %p79 = scmp.eq.s32.totalorder %s20, 1
      %p80 = scmp.ne.s32.totalorder %s75, %s77
      %p81 = scmp.eq.s32.totalorder %s20, 0
      %p82 = por %p80, %p81
      %p83 = scmp.ne.s32.totalorder %s75, %s77
      %p84 = scmp.eq.s32.totalorder %s25, 1
      %p85 = por %p83, %p84
      %p86 = scmp.ne.s32.totalorder %s77, %s78
      %p87 = scmp.eq.s32.totalorder %s25, 0
      %p88 = por %p86, %p87
      %p89 = scmp.ne.s32.totalorder %s77, %s78
      %p90 = scmp.eq.s32.totalorder %s26, 1
      %p91 = por %p89, %p90
      %p93 = scmp.ne.s32.totalorder %s78, %s92
      %p94 = scmp.eq.s32.totalorder %s26, 0
      %p95 = por %p93, %p94
      %s97 = sadd.s32 %s96, 1
      %p100 = scmp.eq.s32.totalorder %s20, 1
      %p101 = scmp.ne.s32.totalorder %s96, %s98
      %p102 = scmp.eq.s32.totalorder %s20, 0
      %p103 = por %p101, %p102
      %p104 = scmp.ne.s32.totalorder %s96, %s98
      %p105 = scmp.eq.s32.totalorder %s25, 1
      %p106 = por %p104, %p105
      %p107 = scmp.ne.s32.totalorder %s98, %s99
      %p108 = scmp.eq.s32.totalorder %s25, 0
      %p109 = por %p107, %p108
      %p110 = scmp.ne.s32.totalorder %s98, %s99
      %p111 = scmp.eq.s32.totalorder %s26, 1
      %p112 = por %p110, %p111
      %p114 = scmp.ne.s32.totalorder %s99, %s113
      %p115 = scmp.eq.s32.totalorder %s26, 0
      %p116 = por %p114, %p115
      %s118 = sadd.s32 %s117, 1
      %p121 = scmp.eq.s32.totalorder %s20, 1
      %p122 = scmp.ne.s32.totalorder %s117, %s119
      %p123 = scmp.eq.s32.totalorder %s20, 0
      %p124 = por %p122, %p123
      %p125 = scmp.ne.s32.totalorder %s117, %s119
      %p126 = scmp.eq.s32.totalorder %s25, 1
      %p127 = por %p125, %p126
      %p128 = scmp.ne.s32.totalorder %s119, %s120
      %p129 = scmp.eq.s32.totalorder %s25, 0
      %p130 = por %p128, %p129
      %p131 = scmp.ne.s32.totalorder %s119, %s120
      %p132 = scmp.eq.s32.totalorder %s26, 1
      %p133 = por %p131, %p132
      %p135 = scmp.ne.s32.totalorder %s120, %s134
      %p136 = scmp.eq.s32.totalorder %s26, 0
      %p137 = por %p135, %p136
      %s139 = sadd.s32 %s138, 1
      %p142 = scmp.eq.s32.totalorder %s20, 1
      %p143 = scmp.ne.s32.totalorder %s138, %s140
      %p144 = scmp.eq.s32.totalorder %s20, 0
      %p145 = por %p143, %p144
      %p146 = scmp.ne.s32.totalorder %s138, %s140
      %p147 = scmp.eq.s32.totalorder %s25, 1
      %p148 = por %p146, %p147
      %p149 = scmp.ne.s32.totalorder %s140, %s141
      %p150 = scmp.eq.s32.totalorder %s25, 0
      %p151 = por %p149, %p150
      %p152 = scmp.ne.s32.totalorder %s140, %s141
      %p153 = scmp.eq.s32.totalorder %s26, 1
      %p154 = por %p152, %p153
      %p156 = scmp.ne.s32.totalorder %s141, %s155
      %p157 = scmp.eq.s32.totalorder %s26, 0
      %p158 = por %p156, %p157
      %s160 = sadd.s32 %s159, 1
      %p163 = scmp.eq.s32.totalorder %s20, 1
      %p164 = scmp.ne.s32.totalorder %s159, %s161
      %p165 = scmp.eq.s32.totalorder %s20, 0
      %p166 = por %p164, %p165
      %p167 = scmp.ne.s32.totalorder %s159, %s161
      %p168 = scmp.eq.s32.totalorder %s25, 1
      %p169 = por %p167, %p168
      %p170 = scmp.ne.s32.totalorder %s161, %s162
      %p171 = scmp.eq.s32.totalorder %s25, 0
      %p172 = por %p170, %p171
      %p173 = scmp.ne.s32.totalorder %s161, %s162
      %p174 = scmp.eq.s32.totalorder %s26, 1
      %p175 = por %p173, %p174
      %p177 = scmp.ne.s32.totalorder %s162, %s176
      %p178 = scmp.eq.s32.totalorder %s26, 0
      %p179 = por %p177, %p178
      %s181 = sadd.s32 %s180, 1
      %p184 = scmp.eq.s32.totalorder %s20, 1
      %p185 = scmp.ne.s32.totalorder %s180, %s182
      %p186 = scmp.eq.s32.totalorder %s20, 0
      %p187 = por %p185, %p186
      %p188 = scmp.ne.s32.totalorder %s180, %s182
      %p189 = scmp.eq.s32.totalorder %s25, 1
      %p190 = por %p188, %p189
      %p191 = scmp.ne.s32.totalorder %s182, %s183
      %p192 = scmp.eq.s32.totalorder %s25, 0
      %p193 = por %p191, %p192
      %p194 = scmp.ne.s32.totalorder %s182, %s183
      %p195 = scmp.eq.s32.totalorder %s26, 1
      %p196 = por %p194, %p195
      %p198 = scmp.ne.s32.totalorder %s183, %s197
      %p199 = scmp.eq.s32.totalorder %s26, 0
      %p200 = por %p198, %p199
      %s201 = ssub.s32 %s20, %s27
      %p202 = scmp.eq.s32.totalorder %s201, 0
      %s204 = sadd.s32 %s203, 1
      %s205 = scalar_select %p202, %s203, %s204
      %p208 = pneg %p202
      %p209 = scmp.eq.s32.totalorder %s20, 1
      %p210 = por %p208, %p209
      %p211 = scmp.ne.s32.totalorder %s203, %s206
      %p212 = scmp.eq.s32.totalorder %s20, 0
      %p213 = por %p211, %p212
      %p214 = scmp.ne.s32.totalorder %s203, %s206
      %p215 = scmp.eq.s32.totalorder %s25, 1
      %p216 = por %p214, %p215
      %p217 = scmp.ne.s32.totalorder %s206, %s207
      %p218 = scmp.eq.s32.totalorder %s25, 0
      %p219 = por %p217, %p218
      %p220 = scmp.ne.s32.totalorder %s206, %s207
      %p221 = scmp.eq.s32.totalorder %s26, 1
      %p222 = por %p220, %p221
      %p224 = scmp.ne.s32.totalorder %s207, %s223
      %p225 = scmp.eq.s32.totalorder %s26, 0
      %p226 = por %p224, %p225
      %p227 = scmp.le.s32.totalorder 1, %s20
      %p228 = scmp.lt.s32.totalorder %s20, 3
      %p229 = pnand %p227, %p228
      %p230 = pneg %p229
      // Predicated region
      $region9: #{tpu_custom_call.1} parent=5 // pred_check
        _
      $region10: #{tpu_custom_call.1} parent=5 // pred_check_branch
        %232 = sbr.rel (%p229) target = $region12
      $region11: #{tpu_custom_call.1} parent=5 // pred_region
        %s233 = ssub.s32 %s20, 1
        // Predicated region
        $region13: #{tpu_custom_call.1} parent=11 // pred_check
          %p234 = pneg %p67
        $region14: #{tpu_custom_call.1} parent=11 // pred_check_branch
          %236 = sbr.rel (%p234) target = $region16
        $region15: #{tpu_custom_call.1} parent=11 // pred_region
          _
        $region16: #{tpu_custom_call.1} parent=11 // pred_fallthru
          _
        // Predicated region
        $region17: #{tpu_custom_call.1} parent=11 // pred_check
          %p237 = pneg %p88
        $region18: #{tpu_custom_call.1} parent=11 // pred_check_branch
          %239 = sbr.rel (%p237) target = $region20
        $region19: #{tpu_custom_call.1} parent=11 // pred_region
          _
        $region20: #{tpu_custom_call.1} parent=11 // pred_fallthru
          _
        // Predicated region
        $region21: #{tpu_custom_call.1} parent=11 // pred_check
          %p240 = pneg %p109
        $region22: #{tpu_custom_call.1} parent=11 // pred_check_branch
          %242 = sbr.rel (%p240) target = $region24
        $region23: #{tpu_custom_call.1} parent=11 // pred_region
          _
        $region24: #{tpu_custom_call.1} parent=11 // pred_fallthru
          _
        // Predicated region
        $region25: #{tpu_custom_call.1} parent=11 // pred_check
          %p243 = pneg %p130
        $region26: #{tpu_custom_call.1} parent=11 // pred_check_branch
          %245 = sbr.rel (%p243) target = $region28
        $region27: #{tpu_custom_call.1} parent=11 // pred_region
          _
        $region28: #{tpu_custom_call.1} parent=11 // pred_fallthru
          _
        // Predicated region
        $region29: #{tpu_custom_call.1} parent=11 // pred_check
          %p246 = pneg %p151
        $region30: #{tpu_custom_call.1} parent=11 // pred_check_branch
          %248 = sbr.rel (%p246) target = $region32
        $region31: #{tpu_custom_call.1} parent=11 // pred_region
          _
        $region32: #{tpu_custom_call.1} parent=11 // pred_fallthru
          _
        // Predicated region
        $region33: #{tpu_custom_call.1} parent=11 // pred_check
          %p249 = pneg %p172
        $region34: #{tpu_custom_call.1} parent=11 // pred_check_branch
          %251 = sbr.rel (%p249) target = $region36
        $region35: #{tpu_custom_call.1} parent=11 // pred_region
          _
        $region36: #{tpu_custom_call.1} parent=11 // pred_fallthru
          _
        // Predicated region
        $region37: #{tpu_custom_call.1} parent=11 // pred_check
          %p252 = pneg %p193
        $region38: #{tpu_custom_call.1} parent=11 // pred_check_branch
          %254 = sbr.rel (%p252) target = $region40
        $region39: #{tpu_custom_call.1} parent=11 // pred_region
          _
        $region40: #{tpu_custom_call.1} parent=11 // pred_fallthru
          _
      $region12: #{tpu_custom_call.1} parent=5 // pred_fallthru
        _
      %p255 = scmp.lt.s32.totalorder %s20, 2
      // Predicated region
      $region41: #{tpu_custom_call.1} parent=5 // pred_check
        %p256 = pneg %p255
      $region42: #{tpu_custom_call.1} parent=5 // pred_check_branch
        %258 = sbr.rel (%p256) target = $region44
      $region43: #{tpu_custom_call.1} parent=5 // pred_region
        // Predicated region
        $region45: #{tpu_custom_call.1} parent=43 // pred_check
          %p259 = pneg %p40
        $region46: #{tpu_custom_call.1} parent=43 // pred_check_branch
          %261 = sbr.rel (%p259) target = $region48
        $region47: #{tpu_custom_call.1} parent=43 // pred_region
          %s262 = sand.u32 %s30, 1
          %s263 = scalar_lea.sflag [#allocation3], %s262
          %s264 = sand.u32 %s30, 1
          %s265 = smul.addr %s264, 80
          %s266 = scalar_lea.vmem [#allocation2], %s265
          %s268 = ssub.s32 1280, 1280
          %269 = vsyncadd %s263, %s268
          %s270 = smul.addr %s20, 20
          %s271 = smul.addr %s270, 64
          %s272 = scalar_lea.hbm %s0, %s271
          %s273 = sshll.u32 %s266, 4
          %s274 = int_to_ptr.vmem [resolvable:$true] %s273
          %279 = dma.hbm_to_vmem [thread:$0]  %s272, 1280, %s274, %s263, 320, 320, 20
        $region48: #{tpu_custom_call.1} parent=43 // pred_fallthru
          _
      $region44: #{tpu_custom_call.1} parent=5 // pred_fallthru
        _
      %p280 = scmp.le.s32.totalorder 1, %s20
      %p281 = scmp.lt.s32.totalorder %s20, 3
      %p282 = pnand %p280, %p281
      %p283 = pneg %p282
      // Predicated region
      $region49: #{tpu_custom_call.1} parent=5 // pred_check
        _
      $region50: #{tpu_custom_call.1} parent=5 // pred_check_branch
        %285 = sbr.rel (%p282) target = $region52
      $region51: #{tpu_custom_call.1} parent=5 // pred_region
        %s286 = ssub.s32 %s20, 1
        %s287 = sand.u32 %s33, 1
        %s288 = scalar_lea.sflag [#allocation3], %s287
        %s289 = sand.u32 %s33, 1
        %s290 = smul.addr %s289, 80
        %s291 = scalar_lea.vmem [#allocation2], %s290
        // Predicated region
        $region53: #{tpu_custom_call.1} parent=51 // pred_check
          %p292 = pneg %p46
        $region54: #{tpu_custom_call.1} parent=51 // pred_check_branch
          %294 = sbr.rel (%p292) target = $region56
        $region55: #{tpu_custom_call.1} parent=51 // pred_region
          %295 = dma.done %s288, 1280
        $region56: #{tpu_custom_call.1} parent=51 // pred_fallthru
          _
        %s296 = sand.u32 %s33, 1
        %s297 = scalar_lea.sflag [#allocation3], %s296
        %s298 = sand.u32 %s33, 1
        %s299 = smul.addr %s298, 80
        %s300 = scalar_lea.vmem [#allocation2], %s299
        %p301 = pneg %p46
        %p302 = pneg %p43
        %p303 = pneg %p67
        %p304 = pneg %p64
        %p305 = pneg %p88
        %p306 = pneg %p85
        %p307 = pneg %p109
        %p308 = pneg %p106
        %p309 = pneg %p130
        %p310 = pneg %p127
        %p311 = pneg %p151
        %p312 = pneg %p148
        %p313 = pneg %p172
        %p314 = pneg %p169
        %p315 = pneg %p193
        %p316 = pneg %p190
        %p317 = pneg %p219
        %p318 = pneg %p216
        %s319 = sand.u32 %s206, 1
        %s320 = scalar_lea.sflag [#allocation4], %s319
        %s321 = sand.u32 %s206, 1
        %s322 = smul.addr %s321, 96
        %s323 = scalar_lea.vmem [#allocation5], %s322
        %v325 = vld [vmem:[%s291] sm:$0xff]
        %v326 = vld [vmem:[%s291 + $0x8] sm:$0xff]
        %v327 = vld [vmem:[%s291 + $0x10] sm:$0xf]
        %v328 = vld [vmem:[%s291 + $0x14] sm:$0xff]
        %v329 = vld [vmem:[%s291 + $0x1c] sm:$0xff]
        %v330 = vld [vmem:[%s291 + $0x24] sm:$0xf]
        %v331 = vld [vmem:[%s291 + $0x28] sm:$0xff]
        %v332 = vld [vmem:[%s291 + $0x30] sm:$0xff]
        %v333 = vld [vmem:[%s291 + $0x38] sm:$0xf]
        %v334 = vld [vmem:[%s291 + $0x3c] sm:$0xff]
        %v335 = vld [vmem:[%s291 + $0x44] sm:$0xff]
        %v336 = vld [vmem:[%s291 + $0x4c] sm:$0xf]
        %v337 = vld [vmem:[%s1] sm:$0x1f]
        %v338 = vld [vmem:[%s2] sm:$0xf]
        %v339 = vld [vmem:[%s3] sm:$0xff]
        %341 = vset.pattern.permute.xlu0 0
        %342 = vperm.xlu0 %341, %v339
        %v343 = vpop.permute.xlu0 %342
        %v357 = vunpack.c.l.b16 %v325
        %v358 = vunpack.c.h.b16 %v325
        %v359 = vunpack.c.l.b16 %v326
        %v360 = vunpack.c.h.b16 %v326
        %v361 = vunpack.c.l.b16 %v327
        %v362 = vunpack.c.l.b16 %v328
        %v363 = vunpack.c.h.b16 %v328
        %v364 = vunpack.c.l.b16 %v329
        %v365 = vunpack.c.h.b16 %v329
        %v366 = vunpack.c.l.b16 %v330
        %v367 = vunpack.c.l.b16 %v331
        %v368 = vunpack.c.h.b16 %v331
        %v369 = vunpack.c.l.b16 %v332
        %v370 = vunpack.c.h.b16 %v332
        %v371 = vunpack.c.l.b16 %v333
        %v372 = vunpack.c.l.b16 %v334
        %v373 = vunpack.c.h.b16 %v334
        %v374 = vunpack.c.l.b16 %v335
        %v375 = vunpack.c.h.b16 %v335
        %v376 = vunpack.c.l.b16 %v336
        %v377 = vpack.c.b16 %v362, %v357
        %v378 = vpack.c.b16 %v363, %v358
        %v379 = vpack.c.b16 %v364, %v359
        %v380 = vpack.c.b16 %v365, %v360
        %v381 = vpack.c.b16 %v366, %v361
        %v382 = vpack.c.b16 %v372, %v367
        %v383 = vpack.c.b16 %v373, %v368
        %v384 = vpack.c.b16 %v374, %v369
        %v385 = vpack.c.b16 %v375, %v370
        %v386 = vpack.c.b16 %v376, %v371
        %vm397 = vcmask 261120
        %v399 = vsel %vm397, %v338, 0
        %401 = vmatprep.subr.bf16.mxu0 %v378
        %402 = vmatpush1.bf16.msra.mxu0 %v377
        %403 = vmatprep.subr.bf16.mxu0 %v383
        %404 = vmatpush1.bf16.msra.mxu0 %v382
        %405 = vmatprep.subr.bf16.mxu0 0
        %406 = vmatpush1.bf16.msra.mxu0 0
        %407 = vmatprep.subr.bf16.mxu0 0
        %408 = vmatpush1.bf16.msra.mxu0 0
        %409 = vmatprep.subr.bf16.mxu0 0
        %410 = vmatpush1.bf16.msra.mxu0 0
        %411 = vmatprep.subr.bf16.mxu0 0
        %412 = vmatpush1.bf16.msra.mxu0 0
        %413 = vmatprep.subr.bf16.mxu0 0
        %414 = vmatpush1.bf16.msra.mxu0 0
        %415 = vmatprep.subr.bf16.mxu0 0
        %416 = vmatpush1.bf16.msra.mxu0 0
        %417 = vmatprep.subr.bf16.mxu0 0
        %418 = vmatpush1.bf16.msra.mxu0 0
        %419 = vmatprep.subr.bf16.mxu0 0
        %420 = vmatpush1.bf16.msra.mxu0 0
        %421 = vmatprep.subr.bf16.mxu0 0
        %422 = vmatpush1.bf16.msra.mxu0 0
        %423 = vmatprep.subr.bf16.mxu0 0
        %424 = vmatpush1.bf16.msra.mxu0 0
        %425 = vmatprep.subr.bf16.mxu0 0
        %426 = vmatpush1.bf16.msra.mxu0 0
        %427 = vmatprep.subr.bf16.mxu0 0
        %428 = vmatpush1.bf16.msra.mxu0 0
        %429 = vmatprep.subr.bf16.mxu0 0
        %430 = vmatpush1.bf16.msra.mxu0 0
        %431 = vmatprep.subr.bf16.mxu0 0
        %432 = vmatpush1.bf16.msra.mxu0 0
        %433 = vmatprep.mubr.bf16.mxu0 0
        %434 = vmatmul.mubr.bf16.gmra.mrb[0].mxu0 %v399
        %v435 = vpop.f32.mrb[0].mxu0
        %v436 = vadd.f32 %v343, %v435
        %v437 = vpop.f32.mrb[0].mxu0
        %v438 = vadd.f32 %v343, %v437
        %v439 = vpop.f32.mrb[0].mxu0
        %v440 = vpop.f32.mrb[0].mxu0
        %441 = vdwg.mxu0
        %442 = vmatprep.subr.bf16.mxu0 %v380
        %443 = vmatpush1.bf16.msra.mxu0 %v379
        %444 = vmatprep.subr.bf16.mxu0 %v385
        %445 = vmatpush1.bf16.msra.mxu0 %v384
        %446 = vmatprep.subr.bf16.mxu0 0
        %447 = vmatpush1.bf16.msra.mxu0 0
        %448 = vmatprep.subr.bf16.mxu0 0
        %449 = vmatpush1.bf16.msra.mxu0 0
        %450 = vmatprep.subr.bf16.mxu0 0
        %451 = vmatpush1.bf16.msra.mxu0 0
        %452 = vmatprep.subr.bf16.mxu0 0
        %453 = vmatpush1.bf16.msra.mxu0 0
        %454 = vmatprep.subr.bf16.mxu0 0
        %455 = vmatpush1.bf16.msra.mxu0 0
        %456 = vmatprep.subr.bf16.mxu0 0
        %457 = vmatpush1.bf16.msra.mxu0 0
        %458 = vmatprep.subr.bf16.mxu0 0
        %459 = vmatpush1.bf16.msra.mxu0 0
        %460 = vmatprep.subr.bf16.mxu0 0
        %461 = vmatpush1.bf16.msra.mxu0 0
        %462 = vmatprep.subr.bf16.mxu0 0
        %463 = vmatpush1.bf16.msra.mxu0 0
        %464 = vmatprep.subr.bf16.mxu0 0
        %465 = vmatpush1.bf16.msra.mxu0 0
        %466 = vmatprep.subr.bf16.mxu0 0
        %467 = vmatpush1.bf16.msra.mxu0 0
        %468 = vmatprep.subr.bf16.mxu0 0
        %469 = vmatpush1.bf16.msra.mxu0 0
        %470 = vmatprep.subr.bf16.mxu0 0
        %471 = vmatpush1.bf16.msra.mxu0 0
        %472 = vmatprep.subr.bf16.mxu0 0
        %473 = vmatpush1.bf16.msra.mxu0 0
        %474 = vmatprep.mubr.bf16.mxu0 0
        %475 = vmatmul.mubr.bf16.gmra.mrb[0].mxu0 %v399
        %v476 = vpop.f32.mrb[0].mxu0
        %v477 = vadd.f32 %v343, %v476
        %v478 = vpop.f32.mrb[0].mxu0
        %v479 = vadd.f32 %v343, %v478
        %v480 = vpop.f32.mrb[0].mxu0
        %v481 = vpop.f32.mrb[0].mxu0
        %482 = vdwg.mxu0
        %483 = vmatprep.subr.bf16.mxu0 0
        %484 = vmatpush1.bf16.msra.mxu0 %v381
        %485 = vmatprep.subr.bf16.mxu0 0
        %486 = vmatpush1.bf16.msra.mxu0 %v386
        %487 = vmatprep.subr.bf16.mxu0 0
        %488 = vmatpush1.bf16.msra.mxu0 0
        %489 = vmatprep.subr.bf16.mxu0 0
        %490 = vmatpush1.bf16.msra.mxu0 0
        %491 = vmatprep.subr.bf16.mxu0 0
        %492 = vmatpush1.bf16.msra.mxu0 0
        %493 = vmatprep.subr.bf16.mxu0 0
        %494 = vmatpush1.bf16.msra.mxu0 0
        %495 = vmatprep.subr.bf16.mxu0 0
        %496 = vmatpush1.bf16.msra.mxu0 0
        %497 = vmatprep.subr.bf16.mxu0 0
        %498 = vmatpush1.bf16.msra.mxu0 0
        %499 = vmatprep.subr.bf16.mxu0 0
        %500 = vmatpush1.bf16.msra.mxu0 0
        %501 = vmatprep.subr.bf16.mxu0 0
        %502 = vmatpush1.bf16.msra.mxu0 0
        %503 = vmatprep.subr.bf16.mxu0 0
        %504 = vmatpush1.bf16.msra.mxu0 0
        %505 = vmatprep.subr.bf16.mxu0 0
        %506 = vmatpush1.bf16.msra.mxu0 0
        %507 = vmatprep.subr.bf16.mxu0 0
        %508 = vmatpush1.bf16.msra.mxu0 0
        %509 = vmatprep.subr.bf16.mxu0 0
        %510 = vmatpush1.bf16.msra.mxu0 0
        %511 = vmatprep.subr.bf16.mxu0 0
        %512 = vmatpush1.bf16.msra.mxu0 0
        %513 = vmatprep.subr.bf16.mxu0 0
        %514 = vmatpush1.bf16.msra.mxu0 0
        %515 = vmatprep.mubr.bf16.mxu0 0
        %516 = vmatmul.mubr.bf16.gmra.mrb[0].mxu0 %v399
        %v517 = vpop.f32.mrb[0].mxu0
        %v518 = vadd.f32 %v343, %v517
        %v519 = vpop.f32.mrb[0].mxu0
        %v520 = vpop.f32.mrb[0].mxu0
        %v521 = vpop.f32.mrb[0].mxu0
        %522 = vdwg.mxu0
        %v523 = vmax.f32 %v436, 0.0
        %v524 = vmax.f32 %v438, 0.0
        %v525 = vmax.f32 %v477, 0.0
        %v526 = vmax.f32 %v479, 0.0
        %v527 = vmax.f32 %v518, 0.0
        %v529 = vlaneseq
        %v530 = vshrl.u32 %v529, 7
        %v531 = vsub.s32 0, %v530
        %v532 = vrot.slane %v337, %v531
        %v533 = vlaneseq
        %v534 = vshrl.u32 %v533, 7
        %v535 = vsub.s32 1, %v534
        %v536 = vrot.slane %v337, %v535
        %v537 = vlaneseq
        %v538 = vshrl.u32 %v537, 7
        %v539 = vsub.s32 2, %v538
        %v540 = vrot.slane %v337, %v539
        %v541 = vlaneseq
        %v542 = vshrl.u32 %v541, 7
        %v543 = vsub.s32 3, %v542
        %v544 = vrot.slane %v337, %v543
        %v545 = vlaneseq
        %v546 = vshrl.u32 %v545, 7
        %v547 = vsub.s32 4, %v546
        %v548 = vrot.slane %v337, %v547
        %v554 = vmul.f32 %v523, %v532
        %v555 = vmul.f32 %v524, %v536
        %v556 = vmul.f32 %v525, %v540
        %v557 = vmul.f32 %v526, %v544
        %v558 = vmul.f32 %v527, %v548
        %563 = vrot.lane.b32.xlu0 %v554, 127
        %v564 = vpop.permute.xlu0 %563
        %565 = vrot.lane.b32.xlu0 %v555, 127
        %v566 = vpop.permute.xlu0 %565
        %567 = vrot.lane.b32.xlu0 %v556, 127
        %v568 = vpop.permute.xlu0 %567
        %569 = vrot.lane.b32.xlu0 %v557, 127
        %v570 = vpop.permute.xlu0 %569
        %vm571 = vcmask 1039360
        %v572 = vsel %vm571, %v564, %v566
        %v573 = vsel %vm571, %v566, %v568
        %v574 = vsel %vm571, %v568, %v570
        %579 = vrot.lane.b32.xlu0 %v554, 126
        %v580 = vpop.permute.xlu0 %579
        %581 = vrot.lane.b32.xlu0 %v555, 126
        %v582 = vpop.permute.xlu0 %581
        %583 = vrot.lane.b32.xlu0 %v556, 126
        %v584 = vpop.permute.xlu0 %583
        %585 = vrot.lane.b32.xlu0 %v557, 126
        %v586 = vpop.permute.xlu0 %585
        %vm587 = vcmask 1031168
        %v588 = vsel %vm587, %v580, %v582
        %v589 = vsel %vm587, %v582, %v584
        %v590 = vsel %vm587, %v584, %v586
        %v595 = vpack.c.bf16 %v572, %v554
        %v596 = vpack.c.bf16 %v573, %v555
        %v597 = vpack.c.bf16 %v574, %v556
        %v598 = vpack.c.bf16 %v570, %v557
        %v599 = vpack.c.bf16 %v588, %v588
        %v600 = vpack.c.bf16 %v589, %v589
        %v601 = vpack.c.bf16 %v590, %v590
        %v602 = vpack.c.bf16 %v586, %v586
        %v603 = vld [vmem:[%s4] sm:$0xf]
        %606 = vrot.lane.b32.xlu0 %v558, 126
        %v607 = vpop.permute.xlu0 %606
        %v608 = vsel %vm587, %v586, %v607
        %v611 = vpack.c.bf16 %v566, %v554
        %v612 = vpack.c.bf16 %v582, %v582
        %v613 = vpack.c.bf16 %v608, %v608
        %s614 = scalar_lea.vmem %s4, 4
        %v615 = vld [vmem:[%s614] sm:$0xf]
        %624 = vrot.lane.b32.xlu0 %v611, 1
        %v625 = vpop.permute.xlu0 %624
        %626 = vrot.lane.b32.xlu0 %v596, 1
        %v627 = vpop.permute.xlu0 %626
        %628 = vrot.lane.b32.xlu0 %v597, 1
        %v629 = vpop.permute.xlu0 %628
        %630 = vrot.lane.b32.xlu0 %v598, 1
        %v631 = vpop.permute.xlu0 %630
        %632 = vrot.lane.b32.xlu0 %v612, 1
        %v633 = vpop.permute.xlu0 %632
        %634 = vrot.lane.b32.xlu0 %v600, 1
        %v635 = vpop.permute.xlu0 %634
        %636 = vrot.lane.b32.xlu0 %v601, 1
        %v637 = vpop.permute.xlu0 %636
        %638 = vrot.lane.b32.xlu0 %v613, 1
        %v639 = vpop.permute.xlu0 %638
        %vm640 = vcmask 7168
        %v641 = vsel %vm640, %v625, %v627
        %v642 = vsel %vm640, %v627, %v629
        %v643 = vsel %vm640, %v629, %v631
        %v644 = vsel %vm640, %v633, %v635
        %v645 = vsel %vm640, %v635, %v637
        %v646 = vsel %vm640, %v637, %v639
        %vm650 = vcmask 195584
        %v652 = vsel %vm650, %v615, 0
        %vm654 = vcmask 1043456
        %v656 = vsel %vm654, %v644, 0
        %v659 = vsel %vm654, %v645, 0
        %v662 = vsel %vm654, %v646, 0
        %664 = vmatprep.subr.bf16.mxu0 %v642
        %665 = vmatpush1.bf16.msra.mxu0 %v641
        %666 = vmatprep.subr.bf16.mxu0 %v659
        %667 = vmatpush1.bf16.msra.mxu0 %v656
        %668 = vmatprep.subr.bf16.mxu0 0
        %669 = vmatpush1.bf16.msra.mxu0 0
        %670 = vmatprep.subr.bf16.mxu0 0
        %671 = vmatpush1.bf16.msra.mxu0 0
        %672 = vmatprep.subr.bf16.mxu0 0
        %673 = vmatpush1.bf16.msra.mxu0 0
        %674 = vmatprep.subr.bf16.mxu0 0
        %675 = vmatpush1.bf16.msra.mxu0 0
        %676 = vmatprep.subr.bf16.mxu0 0
        %677 = vmatpush1.bf16.msra.mxu0 0
        %678 = vmatprep.subr.bf16.mxu0 0
        %679 = vmatpush1.bf16.msra.mxu0 0
        %680 = vmatprep.subr.bf16.mxu0 0
        %681 = vmatpush1.bf16.msra.mxu0 0
        %682 = vmatprep.subr.bf16.mxu0 0
        %683 = vmatpush1.bf16.msra.mxu0 0
        %684 = vmatprep.subr.bf16.mxu0 0
        %685 = vmatpush1.bf16.msra.mxu0 0
        %686 = vmatprep.subr.bf16.mxu0 0
        %687 = vmatpush1.bf16.msra.mxu0 0
        %688 = vmatprep.subr.bf16.mxu0 0
        %689 = vmatpush1.bf16.msra.mxu0 0
        %690 = vmatprep.subr.bf16.mxu0 0
        %691 = vmatpush1.bf16.msra.mxu0 0
        %692 = vmatprep.subr.bf16.mxu0 0
        %693 = vmatpush1.bf16.msra.mxu0 0
        %694 = vmatprep.subr.bf16.mxu0 0
        %695 = vmatpush1.bf16.msra.mxu0 0
        %696 = vmatprep.mubr.bf16.mxu0 0
        %697 = vmatmul.mubr.bf16.gmra.mrb[0].mxu0 %v652
        %v698 = vpop.f32.mrb[0].mxu0
        %v699 = vadd.f32 0.0, %v698
        %v700 = vpop.f32.mrb[0].mxu0
        %v701 = vadd.f32 0.0, %v700
        %v702 = vpop.f32.mrb[0].mxu0
        %v703 = vpop.f32.mrb[0].mxu0
        %704 = vdwg.mxu0
        %705 = vmatprep.subr.bf16.mxu0 0
        %706 = vmatpush1.bf16.msra.mxu0 %v643
        %707 = vmatprep.subr.bf16.mxu0 0
        %708 = vmatpush1.bf16.msra.mxu0 %v662
        %709 = vmatprep.subr.bf16.mxu0 0
        %710 = vmatpush1.bf16.msra.mxu0 0
        %711 = vmatprep.subr.bf16.mxu0 0
        %712 = vmatpush1.bf16.msra.mxu0 0
        %713 = vmatprep.subr.bf16.mxu0 0
        %714 = vmatpush1.bf16.msra.mxu0 0
        %715 = vmatprep.subr.bf16.mxu0 0
        %716 = vmatpush1.bf16.msra.mxu0 0
        %717 = vmatprep.subr.bf16.mxu0 0
        %718 = vmatpush1.bf16.msra.mxu0 0
        %719 = vmatprep.subr.bf16.mxu0 0
        %720 = vmatpush1.bf16.msra.mxu0 0
        %721 = vmatprep.subr.bf16.mxu0 0
        %722 = vmatpush1.bf16.msra.mxu0 0
        %723 = vmatprep.subr.bf16.mxu0 0
        %724 = vmatpush1.bf16.msra.mxu0 0
        %725 = vmatprep.subr.bf16.mxu0 0
        %726 = vmatpush1.bf16.msra.mxu0 0
        %727 = vmatprep.subr.bf16.mxu0 0
        %728 = vmatpush1.bf16.msra.mxu0 0
        %729 = vmatprep.subr.bf16.mxu0 0
        %730 = vmatpush1.bf16.msra.mxu0 0
        %731 = vmatprep.subr.bf16.mxu0 0
        %732 = vmatpush1.bf16.msra.mxu0 0
        %733 = vmatprep.subr.bf16.mxu0 0
        %734 = vmatpush1.bf16.msra.mxu0 0
        %735 = vmatprep.subr.bf16.mxu0 0
        %736 = vmatpush1.bf16.msra.mxu0 0
        %737 = vmatprep.mubr.bf16.mxu0 0
        %738 = vmatmul.mubr.bf16.gmra.mrb[0].mxu0 %v652
        %v739 = vpop.f32.mrb[0].mxu0
        %v740 = vadd.f32 0.0, %v739
        %v741 = vpop.f32.mrb[0].mxu0
        %v742 = vpop.f32.mrb[0].mxu0
        %v743 = vpop.f32.mrb[0].mxu0
        %744 = vdwg.mxu0
        %748 = vrot.lane.b32.xlu0 %v595, 19
        %v749 = vpop.permute.xlu0 %748
        %750 = vrot.lane.b32.xlu0 %v596, 19
        %v751 = vpop.permute.xlu0 %750
        %752 = vrot.lane.b32.xlu0 %v597, 19
        %v753 = vpop.permute.xlu0 %752
        %754 = vrot.lane.b32.xlu0 %v598, 19
        %v755 = vpop.permute.xlu0 %754
        %756 = vrot.lane.b32.xlu0 %v599, 19
        %v757 = vpop.permute.xlu0 %756
        %758 = vrot.lane.b32.xlu0 %v600, 19
        %v759 = vpop.permute.xlu0 %758
        %760 = vrot.lane.b32.xlu0 %v601, 19
        %v761 = vpop.permute.xlu0 %760
        %762 = vrot.lane.b32.xlu0 %v602, 19
        %v763 = vpop.permute.xlu0 %762
        %vm764 = vcmask 154624
        %v765 = vsel %vm764, %v749, %v751
        %v766 = vsel %vm764, %v751, %v753
        %v767 = vsel %vm764, %v753, %v755
        %v768 = vsel %vm764, %v757, %v759
        %v769 = vsel %vm764, %v759, %v761
        %v770 = vsel %vm764, %v761, %v763
        %v775 = vsel %vm650, %v603, 0
        %v778 = vsel %vm654, %v768, 0
        %v781 = vsel %vm654, %v769, 0
        %v784 = vsel %vm654, %v770, 0
        %786 = vmatprep.subr.bf16.mxu0 %v766
        %787 = vmatpush1.bf16.msra.mxu0 %v765
        %788 = vmatprep.subr.bf16.mxu0 %v781
        %789 = vmatpush1.bf16.msra.mxu0 %v778
        %790 = vmatprep.subr.bf16.mxu0 0
        %791 = vmatpush1.bf16.msra.mxu0 0
        %792 = vmatprep.subr.bf16.mxu0 0
        %793 = vmatpush1.bf16.msra.mxu0 0
        %794 = vmatprep.subr.bf16.mxu0 0
        %795 = vmatpush1.bf16.msra.mxu0 0
        %796 = vmatprep.subr.bf16.mxu0 0
        %797 = vmatpush1.bf16.msra.mxu0 0
        %798 = vmatprep.subr.bf16.mxu0 0
        %799 = vmatpush1.bf16.msra.mxu0 0
        %800 = vmatprep.subr.bf16.mxu0 0
        %801 = vmatpush1.bf16.msra.mxu0 0
        %802 = vmatprep.subr.bf16.mxu0 0
        %803 = vmatpush1.bf16.msra.mxu0 0
        %804 = vmatprep.subr.bf16.mxu0 0
        %805 = vmatpush1.bf16.msra.mxu0 0
        %806 = vmatprep.subr.bf16.mxu0 0
        %807 = vmatpush1.bf16.msra.mxu0 0
        %808 = vmatprep.subr.bf16.mxu0 0
        %809 = vmatpush1.bf16.msra.mxu0 0
        %810 = vmatprep.subr.bf16.mxu0 0
        %811 = vmatpush1.bf16.msra.mxu0 0
        %812 = vmatprep.subr.bf16.mxu0 0
        %813 = vmatpush1.bf16.msra.mxu0 0
        %814 = vmatprep.subr.bf16.mxu0 0
        %815 = vmatpush1.bf16.msra.mxu0 0
        %816 = vmatprep.subr.bf16.mxu0 0
        %817 = vmatpush1.bf16.msra.mxu0 0
        %818 = vmatprep.mubr.bf16.mxu0 0
        %819 = vmatmul.mubr.bf16.gmra.mrb[0].mxu0 %v775
        %v820 = vpop.f32.mrb[0].mxu0
        %v821 = vadd.f32 %v699, %v820
        %v822 = vpop.f32.mrb[0].mxu0
        %v823 = vadd.f32 %v701, %v822
        %v824 = vpop.f32.mrb[0].mxu0
        %v825 = vpop.f32.mrb[0].mxu0
        %826 = vdwg.mxu0
        %827 = vmatprep.subr.bf16.mxu0 0
        %828 = vmatpush1.bf16.msra.mxu0 %v767
        %829 = vmatprep.subr.bf16.mxu0 0
        %830 = vmatpush1.bf16.msra.mxu0 %v784
        %831 = vmatprep.subr.bf16.mxu0 0
        %832 = vmatpush1.bf16.msra.mxu0 0
        %833 = vmatprep.subr.bf16.mxu0 0
        %834 = vmatpush1.bf16.msra.mxu0 0
        %835 = vmatprep.subr.bf16.mxu0 0
        %836 = vmatpush1.bf16.msra.mxu0 0
        %837 = vmatprep.subr.bf16.mxu0 0
        %838 = vmatpush1.bf16.msra.mxu0 0
        %839 = vmatprep.subr.bf16.mxu0 0
        %840 = vmatpush1.bf16.msra.mxu0 0
        %841 = vmatprep.subr.bf16.mxu0 0
        %842 = vmatpush1.bf16.msra.mxu0 0
        %843 = vmatprep.subr.bf16.mxu0 0
        %844 = vmatpush1.bf16.msra.mxu0 0
        %845 = vmatprep.subr.bf16.mxu0 0
        %846 = vmatpush1.bf16.msra.mxu0 0
        %847 = vmatprep.subr.bf16.mxu0 0
        %848 = vmatpush1.bf16.msra.mxu0 0
        %849 = vmatprep.subr.bf16.mxu0 0
        %850 = vmatpush1.bf16.msra.mxu0 0
        %851 = vmatprep.subr.bf16.mxu0 0
        %852 = vmatpush1.bf16.msra.mxu0 0
        %853 = vmatprep.subr.bf16.mxu0 0
        %854 = vmatpush1.bf16.msra.mxu0 0
        %855 = vmatprep.subr.bf16.mxu0 0
        %856 = vmatpush1.bf16.msra.mxu0 0
        %857 = vmatprep.subr.bf16.mxu0 0
        %858 = vmatpush1.bf16.msra.mxu0 0
        %859 = vmatprep.mubr.bf16.mxu0 0
        %860 = vmatmul.mubr.bf16.gmra.mrb[0].mxu0 %v775
        %v861 = vpop.f32.mrb[0].mxu0
        %v862 = vadd.f32 %v740, %v861
        %v863 = vpop.f32.mrb[0].mxu0
        %v864 = vpop.f32.mrb[0].mxu0
        %v865 = vpop.f32.mrb[0].mxu0
        %866 = vdwg.mxu0
        %867 = vrot.lane.b32.xlu0 %v558, 127
        %v868 = vpop.permute.xlu0 %867
        %v869 = vsel %vm571, %v570, %v868
        %v873 = vpack.c.bf16 %v869, %v557
        %v874 = vpack.c.bf16 %v868, %v558
        %v875 = vpack.c.bf16 %v607, %v607
        %s876 = scalar_lea.vmem %s4, 8
        %v877 = vld [vmem:[%s876] sm:$0xf]
        %881 = vrot.lane.b32.xlu0 %v596, 111
        %v882 = vpop.permute.xlu0 %881
        %883 = vrot.lane.b32.xlu0 %v597, 111
        %v884 = vpop.permute.xlu0 %883
        %885 = vrot.lane.b32.xlu0 %v873, 111
        %v886 = vpop.permute.xlu0 %885
        %887 = vrot.lane.b32.xlu0 %v874, 111
        %v888 = vpop.permute.xlu0 %887
        %889 = vrot.lane.b32.xlu0 %v600, 111
        %v890 = vpop.permute.xlu0 %889
        %891 = vrot.lane.b32.xlu0 %v601, 111
        %v892 = vpop.permute.xlu0 %891
        %893 = vrot.lane.b32.xlu0 %v613, 111
        %v894 = vpop.permute.xlu0 %893
        %895 = vrot.lane.b32.xlu0 %v875, 111
        %v896 = vpop.permute.xlu0 %895
        %vm897 = vcmask 908288
        %v898 = vsel %vm897, %v882, %v884
        %v899 = vsel %vm897, %v884, %v886
        %v900 = vsel %vm897, %v886, %v888
        %v901 = vsel %vm897, %v890, %v892
        %v902 = vsel %vm897, %v892, %v894
        %v903 = vsel %vm897, %v894, %v896
        %v908 = vsel %vm650, %v877, 0
        %v911 = vsel %vm654, %v901, 0
        %v914 = vsel %vm654, %v902, 0
        %v917 = vsel %vm654, %v903, 0
        %919 = vmatprep.subr.bf16.mxu0 %v899
        %920 = vmatpush1.bf16.msra.mxu0 %v898
        %921 = vmatprep.subr.bf16.mxu0 %v914
        %922 = vmatpush1.bf16.msra.mxu0 %v911
        %923 = vmatprep.subr.bf16.mxu0 0
        %924 = vmatpush1.bf16.msra.mxu0 0
        %925 = vmatprep.subr.bf16.mxu0 0
        %926 = vmatpush1.bf16.msra.mxu0 0
        %927 = vmatprep.subr.bf16.mxu0 0
        %928 = vmatpush1.bf16.msra.mxu0 0
        %929 = vmatprep.subr.bf16.mxu0 0
        %930 = vmatpush1.bf16.msra.mxu0 0
        %931 = vmatprep.subr.bf16.mxu0 0
        %932 = vmatpush1.bf16.msra.mxu0 0
        %933 = vmatprep.subr.bf16.mxu0 0
        %934 = vmatpush1.bf16.msra.mxu0 0
        %935 = vmatprep.subr.bf16.mxu0 0
        %936 = vmatpush1.bf16.msra.mxu0 0
        %937 = vmatprep.subr.bf16.mxu0 0
        %938 = vmatpush1.bf16.msra.mxu0 0
        %939 = vmatprep.subr.bf16.mxu0 0
        %940 = vmatpush1.bf16.msra.mxu0 0
        %941 = vmatprep.subr.bf16.mxu0 0
        %942 = vmatpush1.bf16.msra.mxu0 0
        %943 = vmatprep.subr.bf16.mxu0 0
        %944 = vmatpush1.bf16.msra.mxu0 0
        %945 = vmatprep.subr.bf16.mxu0 0
        %946 = vmatpush1.bf16.msra.mxu0 0
        %947 = vmatprep.subr.bf16.mxu0 0
        %948 = vmatpush1.bf16.msra.mxu0 0
        %949 = vmatprep.subr.bf16.mxu0 0
        %950 = vmatpush1.bf16.msra.mxu0 0
        %951 = vmatprep.mubr.bf16.mxu0 0
        %952 = vmatmul.mubr.bf16.gmra.mrb[0].mxu0 %v908
        %v953 = vpop.f32.mrb[0].mxu0
        %v954 = vadd.f32 0.0, %v953
        %v955 = vpop.f32.mrb[0].mxu0
        %v956 = vadd.f32 0.0, %v955
        %v957 = vpop.f32.mrb[0].mxu0
        %v958 = vpop.f32.mrb[0].mxu0
        %959 = vdwg.mxu0
        %960 = vmatprep.subr.bf16.mxu0 0
        %961 = vmatpush1.bf16.msra.mxu0 %v900
        %962 = vmatprep.subr.bf16.mxu0 0
        %963 = vmatpush1.bf16.msra.mxu0 %v917
        %964 = vmatprep.subr.bf16.mxu0 0
        %965 = vmatpush1.bf16.msra.mxu0 0
        %966 = vmatprep.subr.bf16.mxu0 0
        %967 = vmatpush1.bf16.msra.mxu0 0
        %968 = vmatprep.subr.bf16.mxu0 0
        %969 = vmatpush1.bf16.msra.mxu0 0
        %970 = vmatprep.subr.bf16.mxu0 0
        %971 = vmatpush1.bf16.msra.mxu0 0
        %972 = vmatprep.subr.bf16.mxu0 0
        %973 = vmatpush1.bf16.msra.mxu0 0
        %974 = vmatprep.subr.bf16.mxu0 0
        %975 = vmatpush1.bf16.msra.mxu0 0
        %976 = vmatprep.subr.bf16.mxu0 0
        %977 = vmatpush1.bf16.msra.mxu0 0
        %978 = vmatprep.subr.bf16.mxu0 0
        %979 = vmatpush1.bf16.msra.mxu0 0
        %980 = vmatprep.subr.bf16.mxu0 0
        %981 = vmatpush1.bf16.msra.mxu0 0
        %982 = vmatprep.subr.bf16.mxu0 0
        %983 = vmatpush1.bf16.msra.mxu0 0
        %984 = vmatprep.subr.bf16.mxu0 0
        %985 = vmatpush1.bf16.msra.mxu0 0
        %986 = vmatprep.subr.bf16.mxu0 0
        %987 = vmatpush1.bf16.msra.mxu0 0
        %988 = vmatprep.subr.bf16.mxu0 0
        %989 = vmatpush1.bf16.msra.mxu0 0
        %990 = vmatprep.subr.bf16.mxu0 0
        %991 = vmatpush1.bf16.msra.mxu0 0
        %992 = vmatprep.mubr.bf16.mxu0 0
        %993 = vmatmul.mubr.bf16.gmra.mrb[0].mxu0 %v908
        %v994 = vpop.f32.mrb[0].mxu0
        %v995 = vadd.f32 0.0, %v994
        %v996 = vpop.f32.mrb[0].mxu0
        %v997 = vpop.f32.mrb[0].mxu0
        %v998 = vpop.f32.mrb[0].mxu0
        %999 = vdwg.mxu0
        %v1000 = vadd.f32 %v821, %v954
        %v1001 = vadd.f32 %v823, %v956
        %v1002 = vadd.f32 %v862, %v995
        %v1003 = vld [vmem:[%s5] sm:$0xff]
        %1005 = vset.pattern.permute.xlu0 0
        %1006 = vperm.xlu0 %1005, %v1003
        %v1007 = vpop.permute.xlu0 %1006
        %v1009 = vadd.f32 %v1000, %v1007
        %v1010 = vadd.f32 %v1001, %v1007
        %v1011 = vadd.f32 %v1002, %v1007
        %v1012 = vmax.f32 %v1009, 0.0
        %v1013 = vmax.f32 %v1010, 0.0
        %v1014 = vmax.f32 %v1011, 0.0
        %v1015 = vld [vmem:[%s6] sm:$0xf]
        %v1016 = vld [vmem:[%s6 + $0x4] sm:$0xf]
        %v1017 = vld [vmem:[%s6 + $0x8] sm:$0xf]
        %v1018 = vld [vmem:[%s6 + $0xc] sm:$0xf]
        %v1019 = vpack.c.bf16 %v1012, %v1012
        %v1020 = vpack.c.bf16 %v1013, %v1013
        %v1021 = vpack.c.bf16 %v1014, %v1014
        %v1022 = vld [vmem:[%s7] sm:$0xff]
        %v1023 = vld [vmem:[%s7 + $0x8] sm:$0xff]
        %v1024 = vld [vmem:[%s7 + $0x10] sm:$0xff]
        %v1025 = vld [vmem:[%s7 + $0x18] sm:$0xff]
        %1027 = vset.pattern.permute.xlu0 0
        %1028 = vperm.xlu0 %1027, %v1022
        %v1029 = vpop.permute.xlu0 %1028
        %1032 = vset.pattern.permute.xlu0 0
        %1033 = vperm.xlu0 %1032, %v1023
        %v1034 = vpop.permute.xlu0 %1033
        %1037 = vset.pattern.permute.xlu0 0
        %1038 = vperm.xlu0 %1037, %v1024
        %v1039 = vpop.permute.xlu0 %1038
        %1042 = vset.pattern.permute.xlu0 0
        %1043 = vperm.xlu0 %1042, %v1025
        %v1044 = vpop.permute.xlu0 %1043
        %v1050 = vunpack.c.l.b16 %v1015
        %v1051 = vunpack.c.l.b16 %v1016
        %v1052 = vunpack.c.l.b16 %v1017
        %v1053 = vunpack.c.l.b16 %v1018
        %v1054 = vpack.c.b16 %v1051, %v1050
        %v1055 = vpack.c.b16 %v1053, %v1052
        %vm1056 = vcmask 64512
        %v1058 = vsel %vm1056, %v1054, 0
        %v1061 = vsel %vm1056, %v1055, 0
        %v1064 = vsel %vm654, %v1019, 0
        %v1067 = vsel %vm654, %v1020, 0
        %v1070 = vsel %vm654, %v1021, 0
        %1072 = vmatprep.subr.bf16.mxu0 %v1067
        %1073 = vmatpush1.bf16.msra.mxu0 %v1064
        %1074 = vmatprep.subr.bf16.mxu0 0
        %1075 = vmatpush1.bf16.msra.mxu0 0
        %1076 = vmatprep.subr.bf16.mxu0 0
        %1077 = vmatpush1.bf16.msra.mxu0 0
        %1078 = vmatprep.subr.bf16.mxu0 0
        %1079 = vmatpush1.bf16.msra.mxu0 0
        %1080 = vmatprep.subr.bf16.mxu0 0
        %1081 = vmatpush1.bf16.msra.mxu0 0
        %1082 = vmatprep.subr.bf16.mxu0 0
        %1083 = vmatpush1.bf16.msra.mxu0 0
        %1084 = vmatprep.subr.bf16.mxu0 0
        %1085 = vmatpush1.bf16.msra.mxu0 0
        %1086 = vmatprep.subr.bf16.mxu0 0
        %1087 = vmatpush1.bf16.msra.mxu0 0
        %1088 = vmatprep.subr.bf16.mxu0 0
        %1089 = vmatpush1.bf16.msra.mxu0 0
        %1090 = vmatprep.subr.bf16.mxu0 0
        %1091 = vmatpush1.bf16.msra.mxu0 0
        %1092 = vmatprep.subr.bf16.mxu0 0
        %1093 = vmatpush1.bf16.msra.mxu0 0
        %1094 = vmatprep.subr.bf16.mxu0 0
        %1095 = vmatpush1.bf16.msra.mxu0 0
        %1096 = vmatprep.subr.bf16.mxu0 0
        %1097 = vmatpush1.bf16.msra.mxu0 0
        %1098 = vmatprep.subr.bf16.mxu0 0
        %1099 = vmatpush1.bf16.msra.mxu0 0
        %1100 = vmatprep.subr.bf16.mxu0 0
        %1101 = vmatpush1.bf16.msra.mxu0 0
        %1102 = vmatprep.subr.bf16.mxu0 0
        %1103 = vmatpush1.bf16.msra.mxu0 0
        %1104 = vmatprep.mubr.bf16.mxu0 0
        %1105 = vmatmul.mubr.bf16.gmra.mrb[0].mxu0 %v1058
        %v1106 = vpop.f32.mrb[0].mxu0
        %v1107 = vadd.f32 %v1029, %v1106
        %v1108 = vpop.f32.mrb[0].mxu0
        %v1109 = vadd.f32 %v1029, %v1108
        %v1110 = vpop.f32.mrb[0].mxu0
        %v1111 = vadd.f32 %v1034, %v1110
        %v1112 = vpop.f32.mrb[0].mxu0
        %v1113 = vadd.f32 %v1034, %v1112
        %1114 = vmatprep.mubr.bf16.mxu0 0
        %1115 = vmatmul.mubr.bf16.gmra.mrb[0].mxu0 %v1061
        %v1116 = vpop.f32.mrb[0].mxu0
        %v1117 = vadd.f32 %v1039, %v1116
        %v1118 = vpop.f32.mrb[0].mxu0
        %v1119 = vadd.f32 %v1039, %v1118
        %v1120 = vpop.f32.mrb[0].mxu0
        %v1121 = vadd.f32 %v1044, %v1120
        %v1122 = vpop.f32.mrb[0].mxu0
        %v1123 = vadd.f32 %v1044, %v1122
        %1124 = vdwg.mxu0
        %1125 = vmatprep.subr.bf16.mxu0 0
        %1126 = vmatpush1.bf16.msra.mxu0 %v1070
        %1127 = vmatprep.subr.bf16.mxu0 0
        %1128 = vmatpush1.bf16.msra.mxu0 0
        %1129 = vmatprep.subr.bf16.mxu0 0
        %1130 = vmatpush1.bf16.msra.mxu0 0
        %1131 = vmatprep.subr.bf16.mxu0 0
        %1132 = vmatpush1.bf16.msra.mxu0 0
        %1133 = vmatprep.subr.bf16.mxu0 0
        %1134 = vmatpush1.bf16.msra.mxu0 0
        %1135 = vmatprep.subr.bf16.mxu0 0
        %1136 = vmatpush1.bf16.msra.mxu0 0
        %1137 = vmatprep.subr.bf16.mxu0 0
        %1138 = vmatpush1.bf16.msra.mxu0 0
        %1139 = vmatprep.subr.bf16.mxu0 0
        %1140 = vmatpush1.bf16.msra.mxu0 0
        %1141 = vmatprep.subr.bf16.mxu0 0
        %1142 = vmatpush1.bf16.msra.mxu0 0
        %1143 = vmatprep.subr.bf16.mxu0 0
        %1144 = vmatpush1.bf16.msra.mxu0 0
        %1145 = vmatprep.subr.bf16.mxu0 0
        %1146 = vmatpush1.bf16.msra.mxu0 0
        %1147 = vmatprep.subr.bf16.mxu0 0
        %1148 = vmatpush1.bf16.msra.mxu0 0
        %1149 = vmatprep.subr.bf16.mxu0 0
        %1150 = vmatpush1.bf16.msra.mxu0 0
        %1151 = vmatprep.subr.bf16.mxu0 0
        %1152 = vmatpush1.bf16.msra.mxu0 0
        %1153 = vmatprep.subr.bf16.mxu0 0
        %1154 = vmatpush1.bf16.msra.mxu0 0
        %1155 = vmatprep.subr.bf16.mxu0 0
        %1156 = vmatpush1.bf16.msra.mxu0 0
        %1157 = vmatprep.mubr.bf16.mxu0 0
        %1158 = vmatmul.mubr.bf16.gmra.mrb[0].mxu0 %v1058
        %v1159 = vpop.f32.mrb[0].mxu0
        %v1160 = vadd.f32 %v1029, %v1159
        %v1161 = vpop.f32.mrb[0].mxu0
        %v1162 = vpop.f32.mrb[0].mxu0
        %v1163 = vadd.f32 %v1034, %v1162
        %v1164 = vpop.f32.mrb[0].mxu0
        %1165 = vmatprep.mubr.bf16.mxu0 0
        %1166 = vmatmul.mubr.bf16.gmra.mrb[0].mxu0 %v1061
        %v1167 = vpop.f32.mrb[0].mxu0
        %v1168 = vadd.f32 %v1039, %v1167
        %v1169 = vpop.f32.mrb[0].mxu0
        %v1170 = vpop.f32.mrb[0].mxu0
        %v1171 = vadd.f32 %v1044, %v1170
        %v1172 = vpop.f32.mrb[0].mxu0
        %1173 = vdwg.mxu0
        %v1174 = vrot.slane %v325, 4
        %v1175 = vrot.slane %v326, 4
        %v1176 = vrot.slane %v328, 4
        %v1177 = vrot.slane %v329, 4
        %v1178 = vrot.slane %v331, 4
        %v1179 = vrot.slane %v332, 4
        %v1180 = vrot.slane %v334, 4
        %v1181 = vrot.slane %v335, 4
        %vm1182 = vcmask 1043456
        %v1183 = vsel %vm1182, %v1174, %v1175
        %v1184 = vsel %vm1182, %v1176, %v1177
        %v1185 = vsel %vm1182, %v1178, %v1179
        %v1186 = vsel %vm1182, %v1180, %v1181
        %v1195 = vunpack.c.l.bf16 %v1183
        %v1196 = vunpack.c.h.bf16 %v1183
        %v1197 = vunpack.c.l.bf16 %v1175
        %v1198 = vunpack.c.l.bf16 %v1184
        %v1199 = vunpack.c.h.bf16 %v1184
        %v1200 = vunpack.c.l.bf16 %v1177
        %v1201 = vunpack.c.l.bf16 %v1185
        %v1202 = vunpack.c.h.bf16 %v1185
        %v1203 = vunpack.c.l.bf16 %v1179
        %v1204 = vunpack.c.l.bf16 %v1186
        %v1205 = vunpack.c.h.bf16 %v1186
        %v1206 = vunpack.c.l.bf16 %v1181
        %v1207 = vadd.f32 %v1107, %v1195
        %v1208 = vadd.f32 %v1109, %v1196
        %v1209 = vadd.f32 %v1160, %v1197
        %v1210 = vadd.f32 %v1111, %v1198
        %v1211 = vadd.f32 %v1113, %v1199
        %v1212 = vadd.f32 %v1163, %v1200
        %v1213 = vadd.f32 %v1117, %v1201
        %v1214 = vadd.f32 %v1119, %v1202
        %v1215 = vadd.f32 %v1168, %v1203
        %v1216 = vadd.f32 %v1121, %v1204
        %v1217 = vadd.f32 %v1123, %v1205
        %v1218 = vadd.f32 %v1171, %v1206
        %v1219 = vmax.f32 %v1207, 0.0
        %v1220 = vmax.f32 %v1208, 0.0
        %v1221 = vmax.f32 %v1209, 0.0
        %v1222 = vmax.f32 %v1210, 0.0
        %v1223 = vmax.f32 %v1211, 0.0
        %v1224 = vmax.f32 %v1212, 0.0
        %v1225 = vmax.f32 %v1213, 0.0
        %v1226 = vmax.f32 %v1214, 0.0
        %v1227 = vmax.f32 %v1215, 0.0
        %v1228 = vmax.f32 %v1216, 0.0
        %v1229 = vmax.f32 %v1217, 0.0
        %v1230 = vmax.f32 %v1218, 0.0
        %1231 = vst [vmem:[%s323] sm:$0xff] %v1219
        %1232 = vst [vmem:[%s323 + $0x8] sm:$0xff] %v1220
        %1233 = vst [vmem:[%s323 + $0x10] sm:$0xff] %v1221
        %1234 = vst [vmem:[%s323 + $0x18] sm:$0xff] %v1222
        %1235 = vst [vmem:[%s323 + $0x20] sm:$0xff] %v1223
        %1236 = vst [vmem:[%s323 + $0x28] sm:$0xff] %v1224
        %1237 = vst [vmem:[%s323 + $0x30] sm:$0xff] %v1225
        %1238 = vst [vmem:[%s323 + $0x38] sm:$0xff] %v1226
        %1239 = vst [vmem:[%s323 + $0x40] sm:$0xff] %v1227
        %1240 = vst [vmem:[%s323 + $0x48] sm:$0xff] %v1228
        %1241 = vst [vmem:[%s323 + $0x50] sm:$0xff] %v1229
        %1242 = vst [vmem:[%s323 + $0x58] sm:$0xff] %v1230
        %s1243 = sand.u32 %s206, 1
        %s1244 = scalar_lea.sflag [#allocation4], %s1243
        %s1245 = sand.u32 %s206, 1
        %s1246 = smul.addr %s1245, 96
        %s1247 = scalar_lea.vmem [#allocation5], %s1246
        // Predicated region
        $region57: #{tpu_custom_call.1} parent=51 // pred_check
          %p1248 = pneg %p216
        $region58: #{tpu_custom_call.1} parent=51 // pred_check_branch
          %1250 = sbr.rel (%p1248) target = $region60
        $region59: #{tpu_custom_call.1} parent=51 // pred_region
          %s1252 = ssub.s32 1536, 1536
          %1253 = vsyncadd %s1244, %s1252
          %s1254 = smul.addr %s25, 12
          %s1255 = smul.addr %s1254, 128
          %s1256 = scalar_lea.hbm %s8, %s1255
          %s1257 = sshll.u32 %s1247, 4
          %s1258 = int_to_ptr.vmem [resolvable:$true] %s1257
          %1263 = dma.vmem_to_hbm [thread:$0]  %s1258, 1536, %s1256, %s1244, 384, 384, 24
        $region60: #{tpu_custom_call.1} parent=51 // pred_fallthru
          _
      $region52: #{tpu_custom_call.1} parent=5 // pred_fallthru
        _
      %p1264 = scmp.le.s32.totalorder 2, %s20
      // Predicated region
      $region61: #{tpu_custom_call.1} parent=5 // pred_check
        %p1265 = pneg %p1264
      $region62: #{tpu_custom_call.1} parent=5 // pred_check_branch
        %1267 = sbr.rel (%p1265) target = $region64
      $region63: #{tpu_custom_call.1} parent=5 // pred_region
        %s1268 = ssub.s32 %s20, 2
        // Predicated region
        $region65: #{tpu_custom_call.1} parent=63 // pred_check
          %p1269 = pneg %p222
        $region66: #{tpu_custom_call.1} parent=63 // pred_check_branch
          %1271 = sbr.rel (%p1269) target = $region68
        $region67: #{tpu_custom_call.1} parent=63 // pred_region
          %s1272 = sand.u32 %s207, 1
          %s1273 = scalar_lea.sflag [#allocation4], %s1272
          %s1274 = sand.u32 %s207, 1
          %s1275 = smul.addr %s1274, 96
          %s1276 = scalar_lea.vmem [#allocation5], %s1275
          %1277 = dma.done %s1273, 1536
        $region68: #{tpu_custom_call.1} parent=63 // pred_fallthru
          _
      $region64: #{tpu_custom_call.1} parent=5 // pred_fallthru
        _
    $region6: #{tpu_custom_call.1} parent=1 // loop_footer
      %s24 = sadd.s32 1, %s20
    $region7: #{tpu_custom_call.1} parent=1 // loop_footer_branch
      %19 = sbr.rel target = $region3
    $region8: #{tpu_custom_call.1} parent=1 // loop_exit
      _
    %1278 = vsyncpa [#allocation3], 1
    %s1279 = scalar_lea.sflag [#allocation3], 1
    %1280 = vsyncpa %s1279, 1
    %1281 = vsyncpa [#allocation4], 1
    %s1282 = scalar_lea.sflag [#allocation4], 1
    %1283 = vsyncpa %s1282, 1

</llo_original>
